<compile_context>
chip_gen: v7x
topology: tpu7x:2x2x1
jax: 0.10.0
libtpu: 0.0.40
codegen_flags: <defaults>
</compile_context>

<pallas_src>
import numpy as np

import jax
import jax.numpy as jnp
from jax.experimental import pallas as pl
from jax.experimental.pallas import tpu as pltpu


def _make_cbow_kernel(B, C, P, N, D, V, ROWS):
    inv_c = 1.0 / C
    highest = jax.lax.Precision.HIGHEST

    def kernel(ctx_ref, pn_ref, sel_ref, w_ref, u_ref, v_ref, loss_ref):
        # ctx_ref : (B, C)    int32 context-token ids        (VMEM)
        # pn_ref  : (ROWS, 1) int32 ids, [pos ; neg ; pad]    (VMEM)
        # sel_ref : (ROWS, B) f32 signed batch selector       (VMEM)
        # w_ref   : (ROWS, 1) f32 per-row loss weight         (VMEM)
        # u_ref   : (V, D) "output" embedding table           (VMEM)
        # v_ref   : (V, D) "input"  embedding table           (VMEM)
        # loss_ref: (1, 1) f32 scalar loss                    (SMEM)

        # ---- context mean via a (B, V) count matrix + MXU matmul ----------
        ctx = ctx_ref[...]                                           # (B, C)
        iota_bv = jax.lax.broadcasted_iota(jnp.int32, (B, V), 1)     # (B, V)
        counts = (iota_bv == ctx[:, 0:1]).astype(jnp.float32)
        for c in range(1, C):   # C is a small static window -> unrolled compares
            counts = counts + (iota_bv == ctx[:, c:c + 1]).astype(jnp.float32)
        vm = jnp.dot(counts * inv_c, v_ref[...],
                     preferred_element_type=jnp.float32,
                     precision=highest)                              # (B, D)

        # ---- gather u rows for [pos ; neg] with a one-hot MXU matmul ------
        iota_rv = jax.lax.broadcasted_iota(jnp.int32, (ROWS, V), 1)  # (ROWS, V)
        onehot = (iota_rv == pn_ref[...]).astype(jnp.float32)        # (ROWS, V)
        u_rows = jnp.dot(onehot, u_ref[...],
                         preferred_element_type=jnp.float32,
                         precision=highest)                          # (ROWS, D)

        # ---- all-pairs scores on the MXU, then signed batch selection -----
        uv_all = jax.lax.dot_general(
            u_rows, vm,
            dimension_numbers=(((1,), (1,)), ((), ())),              # u_rows @ vm^T
            preferred_element_type=jnp.float32,
            precision=highest)                                       # (ROWS, B)
        # sel[r, b] = -1 if row r is a pos row of batch b (-> softplus(-uv)),
        #             +1 if row r is a neg row of batch b (-> softplus(+uv)),
        #              0 otherwise (incl. pad rows).
        uv = jnp.sum(uv_all * sel_ref[...], axis=-1, keepdims=True)  # (ROWS, 1)

        # ---- fused weighted BCE reduction ---------------------------------
        sp = jax.nn.softplus(uv)                                     # (ROWS, 1)
        loss_ref[0, 0] = jnp.sum(sp * w_ref[...])

    return kernel


def cbow_loss(u_weight, v_weight, context, pos, neg):
    """Fused CBOW forward pass; returns the scalar BCE loss (float32)."""
    B, C = context.shape
    _, P = pos.shape
    _, N = neg.shape
    V, D = u_weight.shape
    PN = P + N
    ROWS = ((B * PN + 7) // 8) * 8          # 8-sublane-aligned row slab

    # ids laid out [pos row-major ; neg row-major ; zero pad]
    pn_flat = jnp.concatenate(
        [pos.reshape(-1), neg.reshape(-1)]).astype(jnp.int32)
    pn_ids = jnp.pad(pn_flat, (0, ROWS - B * PN)).reshape(ROWS, 1)

    # Static (shape-only) layout metadata, baked in at trace time:
    #   sel : signed batch selector (BCE target sign folded in, 0 for pad)
    #   w   : per-row loss weight   (1/(B*P), 1/(B*N), 0 for pad)
    sel_np = np.zeros((ROWS, B), np.float32)
    w_np = np.zeros((ROWS, 1), np.float32)
    for b in range(B):
        sel_np[b * P:(b + 1) * P, b] = -1.0                           # pos rows
        sel_np[B * P + b * N: B * P + (b + 1) * N, b] = 1.0           # neg rows
    w_np[: B * P, 0] = 1.0 / (B * P)
    w_np[B * P: B * PN, 0] = 1.0 / (B * N)
    sel = jnp.asarray(sel_np)
    w = jnp.asarray(w_np)

    # TODO(synk): for production vocab sizes the tables no longer fit in VMEM
    # (esp. v7x's 64 MiB): store them in bf16, keep them in HBM
    # (memory_space=pl.ANY) and stream vocab tiles via BlockSpec, accumulating
    # the one-hot-tile matmuls across vocab tiles, with a "parallel" batch
    # grid axis so both v7x TensorCores share the work.
    out = pl.pallas_call(
        _make_cbow_kernel(B, C, P, N, D, V, ROWS),
        out_shape=jax.ShapeDtypeStruct((1, 1), jnp.float32),
        in_specs=[
            pl.BlockSpec(memory_space=pltpu.MemorySpace.VMEM),   # context ids
            pl.BlockSpec(memory_space=pltpu.MemorySpace.VMEM),   # pos+neg ids
            pl.BlockSpec(memory_space=pltpu.MemorySpace.VMEM),   # signed selector
            pl.BlockSpec(memory_space=pltpu.MemorySpace.VMEM),   # row weights
            pl.BlockSpec(memory_space=pltpu.MemorySpace.VMEM),   # u table (32 KiB)
            pl.BlockSpec(memory_space=pltpu.MemorySpace.VMEM),   # v table (32 KiB)
        ],
        out_specs=pl.BlockSpec(memory_space=pltpu.MemorySpace.SMEM),
    )(context.astype(jnp.int32), pn_ids, sel, w, u_weight, v_weight)
    return out[0, 0]


def cbow_loss_ref(u_weight, v_weight, context, pos, neg):
    """Pure-JAX reference mirroring the PyTorch module exactly."""
    hi = jax.lax.Precision.HIGHEST
    vm = jnp.take(v_weight, context, axis=0).mean(axis=1)            # (B, D)
    pos_uv = jnp.einsum("bpd,bd->bp", jnp.take(u_weight, pos, axis=0), vm,
                        precision=hi)
    neg_uv = jnp.einsum("bnd,bd->bn", jnp.take(u_weight, neg, axis=0), vm,
                        precision=hi)
    pos_prob = jax.nn.sigmoid(pos_uv)
    neg_prob = jax.nn.sigmoid(neg_uv)
    pos_loss = jnp.mean(-jnp.log(pos_prob))        # BCE vs ones
    neg_loss = jnp.mean(-jnp.log(1.0 - neg_prob))  # BCE vs zeros
    return pos_loss + neg_loss


if __name__ == "__main__":
    vocab_size = 64
    vec_size = 128
    B, C, P, N = 4, 6, 1, 5

    root = jax.random.PRNGKey(0)
    k_u, k_v, k_ctx, k_pos, k_neg = jax.random.split(root, 5)

    # nn.init.uniform_(weight, -1, 1)
    u_weight = jax.random.uniform(k_u, (vocab_size, vec_size),
                                  minval=-1.0, maxval=1.0, dtype=jnp.float32)
    v_weight = jax.random.uniform(k_v, (vocab_size, vec_size),
                                  minval=-1.0, maxval=1.0, dtype=jnp.float32)

    context = jax.random.randint(k_ctx, (B, C), 0, vocab_size, dtype=jnp.int32)
    pos = jax.random.randint(k_pos, (B, P), 0, vocab_size, dtype=jnp.int32)
    neg = jax.random.randint(k_neg, (B, N), 0, vocab_size, dtype=jnp.int32)

    loss = jax.block_until_ready(
        cbow_loss(u_weight, v_weight, context, pos, neg))
    loss_ref = jax.block_until_ready(
        cbow_loss_ref(u_weight, v_weight, context, pos, neg))

    assert jnp.allclose(loss, loss_ref, rtol=2e-3, atol=1e-3), (loss, loss_ref)
    print("KERNEL_OK")
</pallas_src>

<mosaic_0001>
module attributes {stable_mosaic.version = 11 : i64} {
  func.func @kernel(%arg0: memref<4x6xi32, #tpu.memory_space<vmem>>, %arg1: memref<24x1xi32, #tpu.memory_space<vmem>>, %arg2: memref<24x4xf32, #tpu.memory_space<vmem>>, %arg3: memref<24x1xf32, #tpu.memory_space<vmem>>, %arg4: memref<64x128xf32, #tpu.memory_space<vmem>>, %arg5: memref<64x128xf32, #tpu.memory_space<vmem>>, %arg6: memref<1x1xf32, #tpu.memory_space<smem>>) attributes {dimension_semantics = [], scalar_prefetch = 0 : i64, scratch_operands = 0 : i64, tpu.core_type = #tpu.core_type<tc>} {
    %c0 = arith.constant 0 : index
    %c0_0 = arith.constant 0 : index
    %0 = vector.load %arg0[%c0, %c0_0] : memref<4x6xi32, #tpu.memory_space<vmem>>, vector<4x6xi32>
    %1 = tpu.iota {dimensions = array<i32: 1>} : vector<4x64xi32>
    %2 = vector.extract_strided_slice %0 {offsets = [0, 0], sizes = [4, 1], strides = [1, 1]} : vector<4x6xi32> to vector<4x1xi32>
    %3 = vector.broadcast %2 : vector<4x1xi32> to vector<4x64xi32>
    %4 = arith.cmpi eq, %1, %3 : vector<4x64xi32>
    %5 = arith.extui %4 : vector<4x64xi1> to vector<4x64xi32>
    %6 = arith.sitofp %5 : vector<4x64xi32> to vector<4x64xf32>
    %7 = vector.extract_strided_slice %0 {offsets = [0, 1], sizes = [4, 1], strides = [1, 1]} : vector<4x6xi32> to vector<4x1xi32>
    %8 = vector.broadcast %7 : vector<4x1xi32> to vector<4x64xi32>
    %9 = arith.cmpi eq, %1, %8 : vector<4x64xi32>
    %10 = arith.extui %9 : vector<4x64xi1> to vector<4x64xi32>
    %11 = arith.sitofp %10 : vector<4x64xi32> to vector<4x64xf32>
    %12 = arith.addf %6, %11 : vector<4x64xf32>
    %13 = vector.extract_strided_slice %0 {offsets = [0, 2], sizes = [4, 1], strides = [1, 1]} : vector<4x6xi32> to vector<4x1xi32>
    %14 = vector.broadcast %13 : vector<4x1xi32> to vector<4x64xi32>
    %15 = arith.cmpi eq, %1, %14 : vector<4x64xi32>
    %16 = arith.extui %15 : vector<4x64xi1> to vector<4x64xi32>
    %17 = arith.sitofp %16 : vector<4x64xi32> to vector<4x64xf32>
    %18 = arith.addf %12, %17 : vector<4x64xf32>
    %19 = vector.extract_strided_slice %0 {offsets = [0, 3], sizes = [4, 1], strides = [1, 1]} : vector<4x6xi32> to vector<4x1xi32>
    %20 = vector.broadcast %19 : vector<4x1xi32> to vector<4x64xi32>
    %21 = arith.cmpi eq, %1, %20 : vector<4x64xi32>
    %22 = arith.extui %21 : vector<4x64xi1> to vector<4x64xi32>
    %23 = arith.sitofp %22 : vector<4x64xi32> to vector<4x64xf32>
    %24 = arith.addf %18, %23 : vector<4x64xf32>
    %25 = vector.extract_strided_slice %0 {offsets = [0, 4], sizes = [4, 1], strides = [1, 1]} : vector<4x6xi32> to vector<4x1xi32>
    %26 = vector.broadcast %25 : vector<4x1xi32> to vector<4x64xi32>
    %27 = arith.cmpi eq, %1, %26 : vector<4x64xi32>
    %28 = arith.extui %27 : vector<4x64xi1> to vector<4x64xi32>
    %29 = arith.sitofp %28 : vector<4x64xi32> to vector<4x64xf32>
    %30 = arith.addf %24, %29 : vector<4x64xf32>
    %31 = vector.extract_strided_slice %0 {offsets = [0, 5], sizes = [4, 1], strides = [1, 1]} : vector<4x6xi32> to vector<4x1xi32>
    %32 = vector.broadcast %31 : vector<4x1xi32> to vector<4x64xi32>
    %33 = arith.cmpi eq, %1, %32 : vector<4x64xi32>
    %34 = arith.extui %33 : vector<4x64xi1> to vector<4x64xi32>
    %35 = arith.sitofp %34 : vector<4x64xi32> to vector<4x64xf32>
    %36 = arith.addf %30, %35 : vector<4x64xf32>
    %cst = arith.constant 0.166666672 : f32
    %37 = vector.broadcast %cst : f32 to vector<4x64xf32>
    %38 = arith.mulf %36, %37 : vector<4x64xf32>
    %c0_1 = arith.constant 0 : index
    %c0_2 = arith.constant 0 : index
    %39 = vector.load %arg5[%c0_1, %c0_2] : memref<64x128xf32, #tpu.memory_space<vmem>>, vector<64x128xf32>
    %cst_3 = arith.constant dense<0.000000e+00> : vector<4x128xf32>
    %40 = tpu.matmul %38, %39, %cst_3 {dimension_numbers = #tpu.dot_dimension_numbers<[1], [0], [0], [1], [0, 0, 1, 1], [], []>, precision = #tpu.contract_precision<fp32>} : vector<4x64xf32>, vector<64x128xf32>, vector<4x128xf32> -> vector<4x128xf32>
    %41 = tpu.iota {dimensions = array<i32: 1>} : vector<24x64xi32>
    %c0_4 = arith.constant 0 : index
    %c0_5 = arith.constant 0 : index
    %42 = vector.load %arg1[%c0_4, %c0_5] : memref<24x1xi32, #tpu.memory_space<vmem>>, vector<24x1xi32>
    %43 = vector.broadcast %42 : vector<24x1xi32> to vector<24x64xi32>
    %44 = arith.cmpi eq, %41, %43 : vector<24x64xi32>
    %45 = arith.extui %44 : vector<24x64xi1> to vector<24x64xi32>
    %46 = arith.sitofp %45 : vector<24x64xi32> to vector<24x64xf32>
    %c0_6 = arith.constant 0 : index
    %c0_7 = arith.constant 0 : index
    %47 = vector.load %arg4[%c0_6, %c0_7] : memref<64x128xf32, #tpu.memory_space<vmem>>, vector<64x128xf32>
    %cst_8 = arith.constant dense<0.000000e+00> : vector<24x128xf32>
    %48 = tpu.matmul %46, %47, %cst_8 {dimension_numbers = #tpu.dot_dimension_numbers<[1], [0], [0], [1], [0, 0, 1, 1], [], []>, precision = #tpu.contract_precision<fp32>} : vector<24x64xf32>, vector<64x128xf32>, vector<24x128xf32> -> vector<24x128xf32>
    %cst_9 = arith.constant dense<0.000000e+00> : vector<24x4xf32>
    %49 = tpu.matmul %48, %40, %cst_9 {dimension_numbers = #tpu.dot_dimension_numbers<[1], [1], [0], [0], [0, 0, 1, 0], [], []>, precision = #tpu.contract_precision<fp32>} : vector<24x128xf32>, vector<4x128xf32>, vector<24x4xf32> -> vector<24x4xf32>
    %c0_10 = arith.constant 0 : index
    %c0_11 = arith.constant 0 : index
    %50 = vector.load %arg2[%c0_10, %c0_11] : memref<24x4xf32, #tpu.memory_space<vmem>>, vector<24x4xf32>
    %51 = arith.mulf %49, %50 : vector<24x4xf32>
    %cst_12 = arith.constant dense<0.000000e+00> : vector<24xf32>
    %52 = vector.multi_reduction <add>, %51, %cst_12 [1] : vector<24x4xf32> to vector<24xf32>
    %53 = vector.shape_cast %52 : vector<24xf32> to vector<24x1xf32>
    %cst_13 = arith.constant 0.000000e+00 : f32
    %54 = vector.broadcast %cst_13 : f32 to vector<24x1xf32>
    %55 = arith.maximumf %53, %54 : vector<24x1xf32>
    %56 = vector.broadcast %cst_13 : f32 to vector<24x1xf32>
    %57 = arith.subf %53, %56 : vector<24x1xf32>
    %58 = arith.cmpf one, %57, %57 : vector<24x1xf32>
    %59 = vector.broadcast %cst_13 : f32 to vector<24x1xf32>
    %60 = arith.addf %53, %59 : vector<24x1xf32>
    %61 = math.absf %57 : vector<24x1xf32>
    %cst_14 = arith.constant 0.000000e+00 : f32
    %62 = vector.broadcast %cst_14 : f32 to vector<24x1xf32>
    %63 = arith.subf %62, %61 : vector<24x1xf32>
    %64 = math.exp %63 : vector<24x1xf32>
    %65 = math.log1p %64 : vector<24x1xf32>
    %66 = arith.addf %55, %65 : vector<24x1xf32>
    %67 = arith.select %58, %60, %66 : vector<24x1xi1>, vector<24x1xf32>
    %c0_15 = arith.constant 0 : index
    %c0_16 = arith.constant 0 : index
    %68 = vector.load %arg3[%c0_15, %c0_16] : memref<24x1xf32, #tpu.memory_space<vmem>>, vector<24x1xf32>
    %69 = arith.mulf %67, %68 : vector<24x1xf32>
    %70 = vector.shape_cast %69 : vector<24x1xf32> to vector<1x24x1xf32>
    %cst_17 = arith.constant dense<0.000000e+00> : vector<1xf32>
    %71 = vector.multi_reduction <add>, %70, %cst_17 [1, 2] : vector<1x24x1xf32> to vector<1xf32>
    %72 = vector.shape_cast %71 : vector<1xf32> to vector<1x1x1xf32>
    %73 = vector.extract %72[0, 0, 0] : f32 from vector<1x1x1xf32>
    %c0_18 = arith.constant 0 : index
    %c0_19 = arith.constant 0 : index
    %74 = memref.load %arg6[%c0_18, %c0_19] : memref<1x1xf32, #tpu.memory_space<smem>>
    memref.store %73, %arg6[%c0_18, %c0_19] : memref<1x1xf32, #tpu.memory_space<smem>>
    return
  }
}

</mosaic_0001>

<llo_original>
// kernel: tpu_custom_call.1
$region0: #{tpu_custom_call.1}
  #allocation0 [shape = 'u32[]', space=smem, size = 0x4, offset = 0x4, fixed_abs, tag = 'smem constant byte address 0x4 - core index']
  #allocation1 [shape = 'u32[144,128]{1,0:T(1,128)}', space=vmem, size = 0x12000, scoped, tag = 'internal scratch']
  %s0 = inlined_call_operand.vmem [shape: s32[4,6], index: 0, kind: input, shape index: {}]
  %s1 = inlined_call_operand.vmem [shape: s32[24,1], index: 1, kind: input, shape index: {}]
  %s2 = inlined_call_operand.vmem [shape: f32[24,4], index: 2, kind: input, shape index: {}]
  %s3 = inlined_call_operand.vmem [shape: f32[24,1], index: 3, kind: input, shape index: {}]
  %s4 = inlined_call_operand.vmem [shape: f32[64,128], index: 4, kind: input, shape index: {}]
  %s5 = inlined_call_operand.hbm [shape: f32[64,128], index: 5, kind: input, shape index: {}]
  %s6 = inlined_call_operand.hbm [shape: f32[1,1], index: 6, kind: output, shape index: {}]
  %s7 = sld [smem:[#allocation0]]
  $region38: #{tpu_custom_call.1} parent=0
    _
  %s9 = ssub.s32 1, %s7
  %s10 = scalar_select 0, %s9, %s7
  $region1: #{tpu_custom_call.1} parent=0
    #allocation2 [shape = 'u8[32768]{0}', space=vmem, size = 0x8000, scoped, tag = 'input window, operand 5, single buffered']
    #allocation3 [shape = 's32[1]{0}', space=sflag, size = 0x4, scoped, tag = 'scoped memory for tpu_custom_call.1']
    #allocation4 [shape = 's32[1]{0}', space=sflag, size = 0x4, scoped, tag = 'scoped memory for tpu_custom_call.1']
    #allocation5 [shape = 'u8[512]{0}', space=smem, size = 0x200, scoped, tag = 'output window, operand 0, single buffered']
    %11 = vsyncpa [#allocation3], 0
    %12 = vsyncpa [#allocation4], 0
    // Predicated region
    $region2: #{tpu_custom_call.1} parent=1 // pred_check
      _
    $region3: #{tpu_custom_call.1} parent=1 // pred_check_branch
      %14 = sbr.rel (0) target = $region5
    $region4: #{tpu_custom_call.1} parent=1 // pred_region
      _
    $region5: #{tpu_custom_call.1} parent=1 // pred_fallthru
      _
    // Predicated region
    $region6: #{tpu_custom_call.1} parent=1 // pred_check
      _
    $region7: #{tpu_custom_call.1} parent=1 // pred_check_branch
      %16 = sbr.rel (0) target = $region9
    $region8: #{tpu_custom_call.1} parent=1 // pred_region
      _
    $region9: #{tpu_custom_call.1} parent=1 // pred_fallthru
      _
    // Predicated region
    $region10: #{tpu_custom_call.1} parent=1 // pred_check
      _
    $region11: #{tpu_custom_call.1} parent=1 // pred_check_branch
      %18 = sbr.rel (0) target = $region13
    $region12: #{tpu_custom_call.1} parent=1 // pred_region
      _
    $region13: #{tpu_custom_call.1} parent=1 // pred_fallthru
      _
    // Predicated region
    $region14: #{tpu_custom_call.1} parent=1 // pred_check
      _
    $region15: #{tpu_custom_call.1} parent=1 // pred_check_branch
      %20 = sbr.rel (0) target = $region17
    $region16: #{tpu_custom_call.1} parent=1 // pred_region
      _
    $region17: #{tpu_custom_call.1} parent=1 // pred_fallthru
      _
    // Predicated region
    $region18: #{tpu_custom_call.1} parent=1 // pred_check
      _
    $region19: #{tpu_custom_call.1} parent=1 // pred_check_branch
      %22 = sbr.rel (0) target = $region21
    $region20: #{tpu_custom_call.1} parent=1 // pred_region
      _
    $region21: #{tpu_custom_call.1} parent=1 // pred_fallthru
      _
    // Predicated region
    $region22: #{tpu_custom_call.1} parent=1 // pred_check
      _
    $region23: #{tpu_custom_call.1} parent=1 // pred_check_branch
      %24 = sbr.rel (0) target = $region25
    $region24: #{tpu_custom_call.1} parent=1 // pred_region
      %s26 = ssub.s32 1024, 1024
      %27 = vsyncadd [#allocation3], %s26
      %s28 = sshll.u32 [#allocation2], 4
      %s29 = int_to_ptr.vmem [resolvable:$true] %s28
      %34 = dma.hbm_to_vmem [thread:$0]  %s5, 1024, %s29, [#allocation3], 128, 128, 8
    $region25: #{tpu_custom_call.1} parent=1 // pred_fallthru
      _
    // Predicated region
    $region26: #{tpu_custom_call.1} parent=1 // pred_check
      _
    $region27: #{tpu_custom_call.1} parent=1 // pred_check_branch
      %36 = sbr.rel (0) target = $region29
    $region28: #{tpu_custom_call.1} parent=1 // pred_region
      %37 = dma.done [#allocation3], 1024
    $region29: #{tpu_custom_call.1} parent=1 // pred_fallthru
      _
    %v38 = vld [vmem:[%s0] sm:$0xf]
    %v39 = vlaneseq
    %v40 = vand.u32 %v39, 127
    %41 = vset.pattern.permute.xlu0 0
    %42 = vperm.xlu0 %41, %v38
    %v43 = vpop.permute.xlu0 %42
    %vm44 = vcmp.eq.s32.totalorder %v40, %v43
    %v45 = vsel %vm44, 1, 0
    %v46 = vcvt.s32.f32 %v45
    %47 = vset.pattern.permute.xlu0 1
    %48 = vperm.xlu0 %47, %v38
    %v49 = vpop.permute.xlu0 %48
    %vm50 = vcmp.eq.s32.totalorder %v40, %v49
    %v51 = vsel %vm50, 1, 0
    %v52 = vcvt.s32.f32 %v51
    %v53 = vadd.f32 %v46, %v52
    %54 = vset.pattern.permute.xlu0 2
    %55 = vperm.xlu0 %54, %v38
    %v56 = vpop.permute.xlu0 %55
    %vm57 = vcmp.eq.s32.totalorder %v40, %v56
    %v58 = vsel %vm57, 1, 0
    %v59 = vcvt.s32.f32 %v58
    %v60 = vadd.f32 %v53, %v59
    %61 = vset.pattern.permute.xlu0 3
    %62 = vperm.xlu0 %61, %v38
    %v63 = vpop.permute.xlu0 %62
    %vm64 = vcmp.eq.s32.totalorder %v40, %v63
    %v65 = vsel %vm64, 1, 0
    %v66 = vcvt.s32.f32 %v65
    %v67 = vadd.f32 %v60, %v66
    %68 = vset.pattern.permute.xlu0 4
    %69 = vperm.xlu0 %68, %v38
    %v70 = vpop.permute.xlu0 %69
    %vm71 = vcmp.eq.s32.totalorder %v40, %v70
    %v72 = vsel %vm71, 1, 0
    %v73 = vcvt.s32.f32 %v72
    %v74 = vadd.f32 %v67, %v73
    %75 = vset.pattern.permute.xlu0 5
    %76 = vperm.xlu0 %75, %v38
    %v77 = vpop.permute.xlu0 %76
    %vm78 = vcmp.eq.s32.totalorder %v40, %v77
    %v79 = vsel %vm78, 1, 0
    %v80 = vcvt.s32.f32 %v79
    %v81 = vadd.f32 %v74, %v80
    %v82 = vmul.f32 %v81, 0.16666667
    %v83 = vld [vmem:[#allocation2] sm:$0xff]
    %v84 = vld [vmem:[#allocation2 + $0x8] sm:$0xff]
    %v85 = vld [vmem:[#allocation2 + $0x10] sm:$0xff]
    %v86 = vld [vmem:[#allocation2 + $0x18] sm:$0xff]
    %v87 = vld [vmem:[#allocation2 + $0x20] sm:$0xff]
    %v88 = vld [vmem:[#allocation2 + $0x28] sm:$0xff]
    %v89 = vld [vmem:[#allocation2 + $0x30] sm:$0xff]
    %v90 = vld [vmem:[#allocation2 + $0x38] sm:$0xff]
    %vm91 = vcmask 523264
    %v93 = vsel %vm91, %v82, 0
    %95 = vmatprep.subr.mxu0 0.0
    %v96 = vand.u32 %v83, 4294901760
    %97 = vmatpush1.msra.mxu0 %v96
    %98 = vmatprep.subr.mxu0 0.0
    %v99 = vand.u32 %v84, 4294901760
    %100 = vmatpush1.msra.mxu0 %v99
    %101 = vmatprep.subr.mxu0 0.0
    %v102 = vand.u32 %v85, 4294901760
    %103 = vmatpush1.msra.mxu0 %v102
    %104 = vmatprep.subr.mxu0 0.0
    %v105 = vand.u32 %v86, 4294901760
    %106 = vmatpush1.msra.mxu0 %v105
    %107 = vmatprep.subr.mxu0 0.0
    %v108 = vand.u32 %v87, 4294901760
    %109 = vmatpush1.msra.mxu0 %v108
    %110 = vmatprep.subr.mxu0 0.0
    %v111 = vand.u32 %v88, 4294901760
    %112 = vmatpush1.msra.mxu0 %v111
    %113 = vmatprep.subr.mxu0 0.0
    %v114 = vand.u32 %v89, 4294901760
    %115 = vmatpush1.msra.mxu0 %v114
    %116 = vmatprep.subr.mxu0 0.0
    %v117 = vand.u32 %v90, 4294901760
    %118 = vmatpush1.msra.mxu0 %v117
    %119 = vmatprep.subr.mxu0 0.0
    %120 = vmatpush1.msra.mxu0 0.0
    %121 = vmatprep.subr.mxu0 0.0
    %122 = vmatpush1.msra.mxu0 0.0
    %123 = vmatprep.subr.mxu0 0.0
    %124 = vmatpush1.msra.mxu0 0.0
    %125 = vmatprep.subr.mxu0 0.0
    %126 = vmatpush1.msra.mxu0 0.0
    %127 = vmatprep.subr.mxu0 0.0
    %128 = vmatpush1.msra.mxu0 0.0
    %129 = vmatprep.subr.mxu0 0.0
    %130 = vmatpush1.msra.mxu0 0.0
    %131 = vmatprep.subr.mxu0 0.0
    %132 = vmatpush1.msra.mxu0 0.0
    %133 = vmatprep.subr.mxu0 0.0
    %134 = vmatpush1.msra.mxu0 0.0
    %135 = vmatprep.subr.mxu0 0.0
    %136 = vmatpush1.msra.mxu0 0.0
    %137 = vmatprep.subr.mxu0 0.0
    %138 = vmatpush1.msra.mxu0 0.0
    %139 = vmatprep.subr.mxu0 0.0
    %140 = vmatpush1.msra.mxu0 0.0
    %141 = vmatprep.subr.mxu0 0.0
    %142 = vmatpush1.msra.mxu0 0.0
    %143 = vmatprep.subr.mxu0 0.0
    %144 = vmatpush1.msra.mxu0 0.0
    %145 = vmatprep.subr.mxu0 0.0
    %146 = vmatpush1.msra.mxu0 0.0
    %147 = vmatprep.subr.mxu0 0.0
    %148 = vmatpush1.msra.mxu0 0.0
    %149 = vmatprep.subr.mxu0 0.0
    %150 = vmatpush1.msra.mxu0 0.0
    %151 = vmatprep.subr.mxu0 0.0
    %152 = vmatpush1.msra.mxu0 0.0
    %153 = vmatprep.subr.mxu0 0.0
    %154 = vmatpush1.msra.mxu0 0.0
    %155 = vmatprep.subr.mxu0 0.0
    %156 = vmatpush1.msra.mxu0 0.0
    %157 = vmatprep.subr.mxu0 0.0
    %158 = vmatpush1.msra.mxu0 0.0
    %159 = vmatprep.subr.mxu0 0.0
    %160 = vmatpush1.msra.mxu0 0.0
    %161 = vmatprep.subr.mxu0 0.0
    %162 = vmatpush1.msra.mxu0 0.0
    %163 = vmatprep.subr.mxu0 0.0
    %164 = vmatpush1.msra.mxu0 0.0
    %165 = vmatprep.subr.mxu0 0.0
    %166 = vmatpush1.msra.mxu0 0.0
    %167 = vmatprep.mubr.f32.mxu0 0.0
    %v168 = vand.u32 %v93, 4294901760
    %v169 = vsub.f32 %v93, %v168
    %v170 = vand.u32 %v169, 4294901760
    %v171 = vsub.f32 %v169, %v170
    %v172 = vand.u32 %v171, 4294901760
    %173 = vmatmul.mubr.f32.gmra.mrb[0].mxu0 %v172
    %v174 = vpop.f32.mrb[0].mxu0
    %v175 = vadd.f32 0.0, %v174
    %v176 = vpop.f32.mrb[0].mxu0
    %177 = vdwg.mxu0
    %178 = vmatprep.subr.mxu0 0.0
    %v179 = vand.u32 %v83, 4294901760
    %v180 = vsub.f32 %v83, %v179
    %v181 = vand.u32 %v180, 4294901760
    %v182 = vsub.f32 %v180, %v181
    %v183 = vand.u32 %v182, 4294901760
    %184 = vmatpush1.msra.mxu0 %v183
    %185 = vmatprep.subr.mxu0 0.0
    %v186 = vand.u32 %v84, 4294901760
    %v187 = vsub.f32 %v84, %v186
    %v188 = vand.u32 %v187, 4294901760
    %v189 = vsub.f32 %v187, %v188
    %v190 = vand.u32 %v189, 4294901760
    %191 = vmatpush1.msra.mxu0 %v190
    %192 = vmatprep.subr.mxu0 0.0
    %v193 = vand.u32 %v85, 4294901760
    %v194 = vsub.f32 %v85, %v193
    %v195 = vand.u32 %v194, 4294901760
    %v196 = vsub.f32 %v194, %v195
    %v197 = vand.u32 %v196, 4294901760
    %198 = vmatpush1.msra.mxu0 %v197
    %199 = vmatprep.subr.mxu0 0.0
    %v200 = vand.u32 %v86, 4294901760
    %v201 = vsub.f32 %v86, %v200
    %v202 = vand.u32 %v201, 4294901760
    %v203 = vsub.f32 %v201, %v202
    %v204 = vand.u32 %v203, 4294901760
    %205 = vmatpush1.msra.mxu0 %v204
    %206 = vmatprep.subr.mxu0 0.0
    %v207 = vand.u32 %v87, 4294901760
    %v208 = vsub.f32 %v87, %v207
    %v209 = vand.u32 %v208, 4294901760
    %v210 = vsub.f32 %v208, %v209
    %v211 = vand.u32 %v210, 4294901760
    %212 = vmatpush1.msra.mxu0 %v211
    %213 = vmatprep.subr.mxu0 0.0
    %v214 = vand.u32 %v88, 4294901760
    %v215 = vsub.f32 %v88, %v214
    %v216 = vand.u32 %v215, 4294901760
    %v217 = vsub.f32 %v215, %v216
    %v218 = vand.u32 %v217, 4294901760
    %219 = vmatpush1.msra.mxu0 %v218
    %220 = vmatprep.subr.mxu0 0.0
    %v221 = vand.u32 %v89, 4294901760
    %v222 = vsub.f32 %v89, %v221
    %v223 = vand.u32 %v222, 4294901760
    %v224 = vsub.f32 %v222, %v223
    %v225 = vand.u32 %v224, 4294901760
    %226 = vmatpush1.msra.mxu0 %v225
    %227 = vmatprep.subr.mxu0 0.0
    %v228 = vand.u32 %v90, 4294901760
    %v229 = vsub.f32 %v90, %v228
    %v230 = vand.u32 %v229, 4294901760
    %v231 = vsub.f32 %v229, %v230
    %v232 = vand.u32 %v231, 4294901760
    %233 = vmatpush1.msra.mxu0 %v232
    %234 = vmatprep.subr.mxu0 0.0
    %235 = vmatpush1.msra.mxu0 0.0
    %236 = vmatprep.subr.mxu0 0.0
    %237 = vmatpush1.msra.mxu0 0.0
    %238 = vmatprep.subr.mxu0 0.0
    %239 = vmatpush1.msra.mxu0 0.0
    %240 = vmatprep.subr.mxu0 0.0
    %241 = vmatpush1.msra.mxu0 0.0
    %242 = vmatprep.subr.mxu0 0.0
    %243 = vmatpush1.msra.mxu0 0.0
    %244 = vmatprep.subr.mxu0 0.0
    %245 = vmatpush1.msra.mxu0 0.0
    %246 = vmatprep.subr.mxu0 0.0
    %247 = vmatpush1.msra.mxu0 0.0
    %248 = vmatprep.subr.mxu0 0.0
    %249 = vmatpush1.msra.mxu0 0.0
    %250 = vmatprep.subr.mxu0 0.0
    %251 = vmatpush1.msra.mxu0 0.0
    %252 = vmatprep.subr.mxu0 0.0
    %253 = vmatpush1.msra.mxu0 0.0
    %254 = vmatprep.subr.mxu0 0.0
    %255 = vmatpush1.msra.mxu0 0.0
    %256 = vmatprep.subr.mxu0 0.0
    %257 = vmatpush1.msra.mxu0 0.0
    %258 = vmatprep.subr.mxu0 0.0
    %259 = vmatpush1.msra.mxu0 0.0
    %260 = vmatprep.subr.mxu0 0.0
    %261 = vmatpush1.msra.mxu0 0.0
    %262 = vmatprep.subr.mxu0 0.0
    %263 = vmatpush1.msra.mxu0 0.0
    %264 = vmatprep.subr.mxu0 0.0
    %265 = vmatpush1.msra.mxu0 0.0
    %266 = vmatprep.subr.mxu0 0.0
    %267 = vmatpush1.msra.mxu0 0.0
    %268 = vmatprep.subr.mxu0 0.0
    %269 = vmatpush1.msra.mxu0 0.0
    %270 = vmatprep.subr.mxu0 0.0
    %271 = vmatpush1.msra.mxu0 0.0
    %272 = vmatprep.subr.mxu0 0.0
    %273 = vmatpush1.msra.mxu0 0.0
    %274 = vmatprep.subr.mxu0 0.0
    %275 = vmatpush1.msra.mxu0 0.0
    %276 = vmatprep.subr.mxu0 0.0
    %277 = vmatpush1.msra.mxu0 0.0
    %278 = vmatprep.subr.mxu0 0.0
    %279 = vmatpush1.msra.mxu0 0.0
    %280 = vmatprep.subr.mxu0 0.0
    %281 = vmatpush1.msra.mxu0 0.0
    %282 = vmatprep.mubr.f32.mxu0 0.0
    %v283 = vand.u32 %v93, 4294901760
    %284 = vmatmul.mubr.f32.gmra.mrb[0].mxu0 %v283
    %v285 = vpop.f32.mrb[0].mxu0
    %v286 = vadd.f32 %v175, %v285
    %v287 = vpop.f32.mrb[0].mxu0
    %288 = vdwg.mxu0
    %289 = vmatprep.subr.mxu0 0.0
    %v290 = vand.u32 %v83, 4294901760
    %v291 = vsub.f32 %v83, %v290
    %292 = vmatpush1.msra.mxu0 %v291
    %293 = vmatprep.subr.mxu0 0.0
    %v294 = vand.u32 %v84, 4294901760
    %v295 = vsub.f32 %v84, %v294
    %296 = vmatpush1.msra.mxu0 %v295
    %297 = vmatprep.subr.mxu0 0.0
    %v298 = vand.u32 %v85, 4294901760
    %v299 = vsub.f32 %v85, %v298
    %300 = vmatpush1.msra.mxu0 %v299
    %301 = vmatprep.subr.mxu0 0.0
    %v302 = vand.u32 %v86, 4294901760
    %v303 = vsub.f32 %v86, %v302
    %304 = vmatpush1.msra.mxu0 %v303
    %305 = vmatprep.subr.mxu0 0.0
    %v306 = vand.u32 %v87, 4294901760
    %v307 = vsub.f32 %v87, %v306
    %308 = vmatpush1.msra.mxu0 %v307
    %309 = vmatprep.subr.mxu0 0.0
    %v310 = vand.u32 %v88, 4294901760
    %v311 = vsub.f32 %v88, %v310
    %312 = vmatpush1.msra.mxu0 %v311
    %313 = vmatprep.subr.mxu0 0.0
    %v314 = vand.u32 %v89, 4294901760
    %v315 = vsub.f32 %v89, %v314
    %316 = vmatpush1.msra.mxu0 %v315
    %317 = vmatprep.subr.mxu0 0.0
    %v318 = vand.u32 %v90, 4294901760
    %v319 = vsub.f32 %v90, %v318
    %320 = vmatpush1.msra.mxu0 %v319
    %321 = vmatprep.subr.mxu0 0.0
    %322 = vmatpush1.msra.mxu0 0.0
    %323 = vmatprep.subr.mxu0 0.0
    %324 = vmatpush1.msra.mxu0 0.0
    %325 = vmatprep.subr.mxu0 0.0
    %326 = vmatpush1.msra.mxu0 0.0
    %327 = vmatprep.subr.mxu0 0.0
    %328 = vmatpush1.msra.mxu0 0.0
    %329 = vmatprep.subr.mxu0 0.0
    %330 = vmatpush1.msra.mxu0 0.0
    %331 = vmatprep.subr.mxu0 0.0
    %332 = vmatpush1.msra.mxu0 0.0
    %333 = vmatprep.subr.mxu0 0.0
    %334 = vmatpush1.msra.mxu0 0.0
    %335 = vmatprep.subr.mxu0 0.0
    %336 = vmatpush1.msra.mxu0 0.0
    %337 = vmatprep.subr.mxu0 0.0
    %338 = vmatpush1.msra.mxu0 0.0
    %339 = vmatprep.subr.mxu0 0.0
    %340 = vmatpush1.msra.mxu0 0.0
    %341 = vmatprep.subr.mxu0 0.0
    %342 = vmatpush1.msra.mxu0 0.0
    %343 = vmatprep.subr.mxu0 0.0
    %344 = vmatpush1.msra.mxu0 0.0
    %345 = vmatprep.subr.mxu0 0.0
    %346 = vmatpush1.msra.mxu0 0.0
    %347 = vmatprep.subr.mxu0 0.0
    %348 = vmatpush1.msra.mxu0 0.0
    %349 = vmatprep.subr.mxu0 0.0
    %350 = vmatpush1.msra.mxu0 0.0
    %351 = vmatprep.subr.mxu0 0.0
    %352 = vmatpush1.msra.mxu0 0.0
    %353 = vmatprep.subr.mxu0 0.0
    %354 = vmatpush1.msra.mxu0 0.0
    %355 = vmatprep.subr.mxu0 0.0
    %356 = vmatpush1.msra.mxu0 0.0
    %357 = vmatprep.subr.mxu0 0.0
    %358 = vmatpush1.msra.mxu0 0.0
    %359 = vmatprep.subr.mxu0 0.0
    %360 = vmatpush1.msra.mxu0 0.0
    %361 = vmatprep.subr.mxu0 0.0
    %362 = vmatpush1.msra.mxu0 0.0
    %363 = vmatprep.subr.mxu0 0.0
    %364 = vmatpush1.msra.mxu0 0.0
    %365 = vmatprep.subr.mxu0 0.0
    %366 = vmatpush1.msra.mxu0 0.0
    %367 = vmatprep.subr.mxu0 0.0
    %368 = vmatpush1.msra.mxu0 0.0
    %369 = vmatprep.mubr.f32.mxu0 0.0
    %v370 = vand.u32 %v93, 4294901760
    %v371 = vsub.f32 %v93, %v370
    %372 = vmatmul.mubr.f32.gmra.mrb[0].mxu0 %v371
    %v373 = vpop.f32.mrb[0].mxu0
    %v374 = vadd.f32 %v286, %v373
    %v375 = vpop.f32.mrb[0].mxu0
    %376 = vdwg.mxu0
    %377 = vmatprep.subr.mxu0 0.0
    %v378 = vand.u32 %v83, 4294901760
    %379 = vmatpush1.msra.mxu0 %v378
    %380 = vmatprep.subr.mxu0 0.0
    %v381 = vand.u32 %v84, 4294901760
    %382 = vmatpush1.msra.mxu0 %v381
    %383 = vmatprep.subr.mxu0 0.0
    %v384 = vand.u32 %v85, 4294901760
    %385 = vmatpush1.msra.mxu0 %v384
    %386 = vmatprep.subr.mxu0 0.0
    %v387 = vand.u32 %v86, 4294901760
    %388 = vmatpush1.msra.mxu0 %v387
    %389 = vmatprep.subr.mxu0 0.0
    %v390 = vand.u32 %v87, 4294901760
    %391 = vmatpush1.msra.mxu0 %v390
    %392 = vmatprep.subr.mxu0 0.0
    %v393 = vand.u32 %v88, 4294901760
    %394 = vmatpush1.msra.mxu0 %v393
    %395 = vmatprep.subr.mxu0 0.0
    %v396 = vand.u32 %v89, 4294901760
    %397 = vmatpush1.msra.mxu0 %v396
    %398 = vmatprep.subr.mxu0 0.0
    %v399 = vand.u32 %v90, 4294901760
    %400 = vmatpush1.msra.mxu0 %v399
    %401 = vmatprep.subr.mxu0 0.0
    %402 = vmatpush1.msra.mxu0 0.0
    %403 = vmatprep.subr.mxu0 0.0
    %404 = vmatpush1.msra.mxu0 0.0
    %405 = vmatprep.subr.mxu0 0.0
    %406 = vmatpush1.msra.mxu0 0.0
    %407 = vmatprep.subr.mxu0 0.0
    %408 = vmatpush1.msra.mxu0 0.0
    %409 = vmatprep.subr.mxu0 0.0
    %410 = vmatpush1.msra.mxu0 0.0
    %411 = vmatprep.subr.mxu0 0.0
    %412 = vmatpush1.msra.mxu0 0.0
    %413 = vmatprep.subr.mxu0 0.0
    %414 = vmatpush1.msra.mxu0 0.0
    %415 = vmatprep.subr.mxu0 0.0
    %416 = vmatpush1.msra.mxu0 0.0
    %417 = vmatprep.subr.mxu0 0.0
    %418 = vmatpush1.msra.mxu0 0.0
    %419 = vmatprep.subr.mxu0 0.0
    %420 = vmatpush1.msra.mxu0 0.0
    %421 = vmatprep.subr.mxu0 0.0
    %422 = vmatpush1.msra.mxu0 0.0
    %423 = vmatprep.subr.mxu0 0.0
    %424 = vmatpush1.msra.mxu0 0.0
    %425 = vmatprep.subr.mxu0 0.0
    %426 = vmatpush1.msra.mxu0 0.0
    %427 = vmatprep.subr.mxu0 0.0
    %428 = vmatpush1.msra.mxu0 0.0
    %429 = vmatprep.subr.mxu0 0.0
    %430 = vmatpush1.msra.mxu0 0.0
    %431 = vmatprep.subr.mxu0 0.0
    %432 = vmatpush1.msra.mxu0 0.0
    %433 = vmatprep.subr.mxu0 0.0
    %434 = vmatpush1.msra.mxu0 0.0
    %435 = vmatprep.subr.mxu0 0.0
    %436 = vmatpush1.msra.mxu0 0.0
    %437 = vmatprep.subr.mxu0 0.0
    %438 = vmatpush1.msra.mxu0 0.0
    %439 = vmatprep.subr.mxu0 0.0
    %440 = vmatpush1.msra.mxu0 0.0
    %441 = vmatprep.subr.mxu0 0.0
    %442 = vmatpush1.msra.mxu0 0.0
    %443 = vmatprep.subr.mxu0 0.0
    %444 = vmatpush1.msra.mxu0 0.0
    %445 = vmatprep.subr.mxu0 0.0
    %446 = vmatpush1.msra.mxu0 0.0
    %447 = vmatprep.subr.mxu0 0.0
    %448 = vmatpush1.msra.mxu0 0.0
    %449 = vmatprep.mubr.f32.mxu0 0.0
    %v450 = vand.u32 %v93, 4294901760
    %v451 = vsub.f32 %v93, %v450
    %v452 = vand.u32 %v451, 4294901760
    %453 = vmatmul.mubr.f32.gmra.mrb[0].mxu0 %v452
    %v454 = vpop.f32.mrb[0].mxu0
    %v455 = vadd.f32 %v374, %v454
    %v456 = vpop.f32.mrb[0].mxu0
    %457 = vdwg.mxu0
    %458 = vmatprep.subr.mxu0 0.0
    %v459 = vand.u32 %v83, 4294901760
    %v460 = vsub.f32 %v83, %v459
    %v461 = vand.u32 %v460, 4294901760
    %462 = vmatpush1.msra.mxu0 %v461
    %463 = vmatprep.subr.mxu0 0.0
    %v464 = vand.u32 %v84, 4294901760
    %v465 = vsub.f32 %v84, %v464
    %v466 = vand.u32 %v465, 4294901760
    %467 = vmatpush1.msra.mxu0 %v466
    %468 = vmatprep.subr.mxu0 0.0
    %v469 = vand.u32 %v85, 4294901760
    %v470 = vsub.f32 %v85, %v469
    %v471 = vand.u32 %v470, 4294901760
    %472 = vmatpush1.msra.mxu0 %v471
    %473 = vmatprep.subr.mxu0 0.0
    %v474 = vand.u32 %v86, 4294901760
    %v475 = vsub.f32 %v86, %v474
    %v476 = vand.u32 %v475, 4294901760
    %477 = vmatpush1.msra.mxu0 %v476
    %478 = vmatprep.subr.mxu0 0.0
    %v479 = vand.u32 %v87, 4294901760
    %v480 = vsub.f32 %v87, %v479
    %v481 = vand.u32 %v480, 4294901760
    %482 = vmatpush1.msra.mxu0 %v481
    %483 = vmatprep.subr.mxu0 0.0
    %v484 = vand.u32 %v88, 4294901760
    %v485 = vsub.f32 %v88, %v484
    %v486 = vand.u32 %v485, 4294901760
    %487 = vmatpush1.msra.mxu0 %v486
    %488 = vmatprep.subr.mxu0 0.0
    %v489 = vand.u32 %v89, 4294901760
    %v490 = vsub.f32 %v89, %v489
    %v491 = vand.u32 %v490, 4294901760
    %492 = vmatpush1.msra.mxu0 %v491
    %493 = vmatprep.subr.mxu0 0.0
    %v494 = vand.u32 %v90, 4294901760
    %v495 = vsub.f32 %v90, %v494
    %v496 = vand.u32 %v495, 4294901760
    %497 = vmatpush1.msra.mxu0 %v496
    %498 = vmatprep.subr.mxu0 0.0
    %499 = vmatpush1.msra.mxu0 0.0
    %500 = vmatprep.subr.mxu0 0.0
    %501 = vmatpush1.msra.mxu0 0.0
    %502 = vmatprep.subr.mxu0 0.0
    %503 = vmatpush1.msra.mxu0 0.0
    %504 = vmatprep.subr.mxu0 0.0
    %505 = vmatpush1.msra.mxu0 0.0
    %506 = vmatprep.subr.mxu0 0.0
    %507 = vmatpush1.msra.mxu0 0.0
    %508 = vmatprep.subr.mxu0 0.0
    %509 = vmatpush1.msra.mxu0 0.0
    %510 = vmatprep.subr.mxu0 0.0
    %511 = vmatpush1.msra.mxu0 0.0
    %512 = vmatprep.subr.mxu0 0.0
    %513 = vmatpush1.msra.mxu0 0.0
    %514 = vmatprep.subr.mxu0 0.0
    %515 = vmatpush1.msra.mxu0 0.0
    %516 = vmatprep.subr.mxu0 0.0
    %517 = vmatpush1.msra.mxu0 0.0
    %518 = vmatprep.subr.mxu0 0.0
    %519 = vmatpush1.msra.mxu0 0.0
    %520 = vmatprep.subr.mxu0 0.0
    %521 = vmatpush1.msra.mxu0 0.0
    %522 = vmatprep.subr.mxu0 0.0
    %523 = vmatpush1.msra.mxu0 0.0
    %524 = vmatprep.subr.mxu0 0.0
    %525 = vmatpush1.msra.mxu0 0.0
    %526 = vmatprep.subr.mxu0 0.0
    %527 = vmatpush1.msra.mxu0 0.0
    %528 = vmatprep.subr.mxu0 0.0
    %529 = vmatpush1.msra.mxu0 0.0
    %530 = vmatprep.subr.mxu0 0.0
    %531 = vmatpush1.msra.mxu0 0.0
    %532 = vmatprep.subr.mxu0 0.0
    %533 = vmatpush1.msra.mxu0 0.0
    %534 = vmatprep.subr.mxu0 0.0
    %535 = vmatpush1.msra.mxu0 0.0
    %536 = vmatprep.subr.mxu0 0.0
    %537 = vmatpush1.msra.mxu0 0.0
    %538 = vmatprep.subr.mxu0 0.0
    %539 = vmatpush1.msra.mxu0 0.0
    %540 = vmatprep.subr.mxu0 0.0
    %541 = vmatpush1.msra.mxu0 0.0
    %542 = vmatprep.subr.mxu0 0.0
    %543 = vmatpush1.msra.mxu0 0.0
    %544 = vmatprep.subr.mxu0 0.0
    %545 = vmatpush1.msra.mxu0 0.0
    %546 = vmatprep.mubr.f32.mxu0 0.0
    %v547 = vand.u32 %v93, 4294901760
    %548 = vmatmul.mubr.f32.gmra.mrb[0].mxu0 %v547
    %v549 = vpop.f32.mrb[0].mxu0
    %v550 = vadd.f32 %v455, %v549
    %v551 = vpop.f32.mrb[0].mxu0
    %552 = vdwg.mxu0
    %553 = vmatprep.subr.mxu0 0.0
    %v554 = vand.u32 %v83, 4294901760
    %555 = vmatpush1.msra.mxu0 %v554
    %556 = vmatprep.subr.mxu0 0.0
    %v557 = vand.u32 %v84, 4294901760
    %558 = vmatpush1.msra.mxu0 %v557
    %559 = vmatprep.subr.mxu0 0.0
    %v560 = vand.u32 %v85, 4294901760
    %561 = vmatpush1.msra.mxu0 %v560
    %562 = vmatprep.subr.mxu0 0.0
    %v563 = vand.u32 %v86, 4294901760
    %564 = vmatpush1.msra.mxu0 %v563
    %565 = vmatprep.subr.mxu0 0.0
    %v566 = vand.u32 %v87, 4294901760
    %567 = vmatpush1.msra.mxu0 %v566
    %568 = vmatprep.subr.mxu0 0.0
    %v569 = vand.u32 %v88, 4294901760
    %570 = vmatpush1.msra.mxu0 %v569
    %571 = vmatprep.subr.mxu0 0.0
    %v572 = vand.u32 %v89, 4294901760
    %573 = vmatpush1.msra.mxu0 %v572
    %574 = vmatprep.subr.mxu0 0.0
    %v575 = vand.u32 %v90, 4294901760
    %576 = vmatpush1.msra.mxu0 %v575
    %577 = vmatprep.subr.mxu0 0.0
    %578 = vmatpush1.msra.mxu0 0.0
    %579 = vmatprep.subr.mxu0 0.0
    %580 = vmatpush1.msra.mxu0 0.0
    %581 = vmatprep.subr.mxu0 0.0
    %582 = vmatpush1.msra.mxu0 0.0
    %583 = vmatprep.subr.mxu0 0.0
    %584 = vmatpush1.msra.mxu0 0.0
    %585 = vmatprep.subr.mxu0 0.0
    %586 = vmatpush1.msra.mxu0 0.0
    %587 = vmatprep.subr.mxu0 0.0
    %588 = vmatpush1.msra.mxu0 0.0
    %589 = vmatprep.subr.mxu0 0.0
    %590 = vmatpush1.msra.mxu0 0.0
    %591 = vmatprep.subr.mxu0 0.0
    %592 = vmatpush1.msra.mxu0 0.0
    %593 = vmatprep.subr.mxu0 0.0
    %594 = vmatpush1.msra.mxu0 0.0
    %595 = vmatprep.subr.mxu0 0.0
    %596 = vmatpush1.msra.mxu0 0.0
    %597 = vmatprep.subr.mxu0 0.0
    %598 = vmatpush1.msra.mxu0 0.0
    %599 = vmatprep.subr.mxu0 0.0
    %600 = vmatpush1.msra.mxu0 0.0
    %601 = vmatprep.subr.mxu0 0.0
    %602 = vmatpush1.msra.mxu0 0.0
    %603 = vmatprep.subr.mxu0 0.0
    %604 = vmatpush1.msra.mxu0 0.0
    %605 = vmatprep.subr.mxu0 0.0
    %606 = vmatpush1.msra.mxu0 0.0
    %607 = vmatprep.subr.mxu0 0.0
    %608 = vmatpush1.msra.mxu0 0.0
    %609 = vmatprep.subr.mxu0 0.0
    %610 = vmatpush1.msra.mxu0 0.0
    %611 = vmatprep.subr.mxu0 0.0
    %612 = vmatpush1.msra.mxu0 0.0
    %613 = vmatprep.subr.mxu0 0.0
    %614 = vmatpush1.msra.mxu0 0.0
    %615 = vmatprep.subr.mxu0 0.0
    %616 = vmatpush1.msra.mxu0 0.0
    %617 = vmatprep.subr.mxu0 0.0
    %618 = vmatpush1.msra.mxu0 0.0
    %619 = vmatprep.subr.mxu0 0.0
    %620 = vmatpush1.msra.mxu0 0.0
    %621 = vmatprep.subr.mxu0 0.0
    %622 = vmatpush1.msra.mxu0 0.0
    %623 = vmatprep.subr.mxu0 0.0
    %624 = vmatpush1.msra.mxu0 0.0
    %625 = vmatprep.mubr.f32.mxu0 0.0
    %v626 = vand.u32 %v93, 4294901760
    %627 = vmatmul.mubr.f32.gmra.mrb[0].mxu0 %v626
    %v628 = vpop.f32.mrb[0].mxu0
    %v629 = vadd.f32 %v550, %v628
    %v630 = vpop.f32.mrb[0].mxu0
    %631 = vdwg.mxu0
    %v632 = vld [vmem:[%s1] sm:$0xff]
    %v633 = vld [vmem:[%s1 + $0x8] sm:$0xff]
    %v634 = vld [vmem:[%s1 + $0x10] sm:$0xff]
    %635 = vset.pattern.permute.xlu0 0
    %636 = vperm.xlu0 %635, %v632
    %v637 = vpop.permute.xlu0 %636
    %638 = vset.pattern.permute.xlu0 0
    %639 = vperm.xlu0 %638, %v633
    %v640 = vpop.permute.xlu0 %639
    %641 = vset.pattern.permute.xlu0 0
    %642 = vperm.xlu0 %641, %v634
    %v643 = vpop.permute.xlu0 %642
    %vm644 = vcmp.eq.s32.totalorder %v40, %v637
    %vm645 = vcmp.eq.s32.totalorder %v40, %v640
    %vm646 = vcmp.eq.s32.totalorder %v40, %v643
    %v647 = vsel %vm644, 1, 0
    %v648 = vsel %vm645, 1, 0
    %v649 = vsel %vm646, 1, 0
    %v650 = vcvt.s32.f32 %v647
    %v651 = vcvt.s32.f32 %v648
    %v652 = vcvt.s32.f32 %v649
    %v653 = vld [vmem:[%s4] sm:$0xff]
    %v654 = vld [vmem:[%s4 + $0x8] sm:$0xff]
    %v655 = vld [vmem:[%s4 + $0x10] sm:$0xff]
    %v656 = vld [vmem:[%s4 + $0x18] sm:$0xff]
    %v657 = vld [vmem:[%s4 + $0x20] sm:$0xff]
    %v658 = vld [vmem:[%s4 + $0x28] sm:$0xff]
    %v659 = vld [vmem:[%s4 + $0x30] sm:$0xff]
    %v660 = vld [vmem:[%s4 + $0x38] sm:$0xff]
    %v662 = vsel %vm91, %v650, 0
    %v665 = vsel %vm91, %v651, 0
    %v668 = vsel %vm91, %v652, 0
    %670 = vmatprep.subr.mxu0 0.0
    %v671 = vand.u32 %v653, 4294901760
    %672 = vmatpush1.msra.mxu0 %v671
    %673 = vmatprep.subr.mxu0 0.0
    %v674 = vand.u32 %v654, 4294901760
    %675 = vmatpush1.msra.mxu0 %v674
    %676 = vmatprep.subr.mxu0 0.0
    %v677 = vand.u32 %v655, 4294901760
    %678 = vmatpush1.msra.mxu0 %v677
    %679 = vmatprep.subr.mxu0 0.0
    %v680 = vand.u32 %v656, 4294901760
    %681 = vmatpush1.msra.mxu0 %v680
    %682 = vmatprep.subr.mxu0 0.0
    %v683 = vand.u32 %v657, 4294901760
    %684 = vmatpush1.msra.mxu0 %v683
    %685 = vmatprep.subr.mxu0 0.0
    %v686 = vand.u32 %v658, 4294901760
    %687 = vmatpush1.msra.mxu0 %v686
    %688 = vmatprep.subr.mxu0 0.0
    %v689 = vand.u32 %v659, 4294901760
    %690 = vmatpush1.msra.mxu0 %v689
    %691 = vmatprep.subr.mxu0 0.0
    %v692 = vand.u32 %v660, 4294901760
    %693 = vmatpush1.msra.mxu0 %v692
    %694 = vmatprep.subr.mxu0 0.0
    %695 = vmatpush1.msra.mxu0 0.0
    %696 = vmatprep.subr.mxu0 0.0
    %697 = vmatpush1.msra.mxu0 0.0
    %698 = vmatprep.subr.mxu0 0.0
    %699 = vmatpush1.msra.mxu0 0.0
    %700 = vmatprep.subr.mxu0 0.0
    %701 = vmatpush1.msra.mxu0 0.0
    %702 = vmatprep.subr.mxu0 0.0
    %703 = vmatpush1.msra.mxu0 0.0
    %704 = vmatprep.subr.mxu0 0.0
    %705 = vmatpush1.msra.mxu0 0.0
    %706 = vmatprep.subr.mxu0 0.0
    %707 = vmatpush1.msra.mxu0 0.0
    %708 = vmatprep.subr.mxu0 0.0
    %709 = vmatpush1.msra.mxu0 0.0
    %710 = vmatprep.subr.mxu0 0.0
    %711 = vmatpush1.msra.mxu0 0.0
    %712 = vmatprep.subr.mxu0 0.0
    %713 = vmatpush1.msra.mxu0 0.0
    %714 = vmatprep.subr.mxu0 0.0
    %715 = vmatpush1.msra.mxu0 0.0
    %716 = vmatprep.subr.mxu0 0.0
    %717 = vmatpush1.msra.mxu0 0.0
    %718 = vmatprep.subr.mxu0 0.0
    %719 = vmatpush1.msra.mxu0 0.0
    %720 = vmatprep.subr.mxu0 0.0
    %721 = vmatpush1.msra.mxu0 0.0
    %722 = vmatprep.subr.mxu0 0.0
    %723 = vmatpush1.msra.mxu0 0.0
    %724 = vmatprep.subr.mxu0 0.0
    %725 = vmatpush1.msra.mxu0 0.0
    %726 = vmatprep.subr.mxu0 0.0
    %727 = vmatpush1.msra.mxu0 0.0
    %728 = vmatprep.subr.mxu0 0.0
    %729 = vmatpush1.msra.mxu0 0.0
    %730 = vmatprep.subr.mxu0 0.0
    %731 = vmatpush1.msra.mxu0 0.0
    %732 = vmatprep.subr.mxu0 0.0
    %733 = vmatpush1.msra.mxu0 0.0
    %734 = vmatprep.subr.mxu0 0.0
    %735 = vmatpush1.msra.mxu0 0.0
    %736 = vmatprep.subr.mxu0 0.0
    %737 = vmatpush1.msra.mxu0 0.0
    %738 = vmatprep.subr.mxu0 0.0
    %739 = vmatpush1.msra.mxu0 0.0
    %740 = vmatprep.subr.mxu0 0.0
    %741 = vmatpush1.msra.mxu0 0.0
    %742 = vmatprep.mubr.f32.mxu0 0.0
    %v743 = vand.u32 %v662, 4294901760
    %v744 = vsub.f32 %v662, %v743
    %v745 = vand.u32 %v744, 4294901760
    %v746 = vsub.f32 %v744, %v745
    %v747 = vand.u32 %v746, 4294901760
    %748 = vmatmul.mubr.f32.gmra.mrb[0].mxu0 %v747
    %v749 = vpop.f32.mrb[0].mxu0
    %v750 = vadd.f32 0.0, %v749
    %v751 = vpop.f32.mrb[0].mxu0
    %752 = vmatprep.mubr.f32.mxu0 0.0
    %v753 = vand.u32 %v665, 4294901760
    %v754 = vsub.f32 %v665, %v753
    %v755 = vand.u32 %v754, 4294901760
    %v756 = vsub.f32 %v754, %v755
    %v757 = vand.u32 %v756, 4294901760
    %758 = vmatmul.mubr.f32.gmra.mrb[0].mxu0 %v757
    %v759 = vpop.f32.mrb[0].mxu0
    %v760 = vadd.f32 0.0, %v759
    %v761 = vpop.f32.mrb[0].mxu0
    %762 = vmatprep.mubr.f32.mxu0 0.0
    %v763 = vand.u32 %v668, 4294901760
    %v764 = vsub.f32 %v668, %v763
    %v765 = vand.u32 %v764, 4294901760
    %v766 = vsub.f32 %v764, %v765
    %v767 = vand.u32 %v766, 4294901760
    %768 = vmatmul.mubr.f32.gmra.mrb[0].mxu0 %v767
    %v769 = vpop.f32.mrb[0].mxu0
    %v770 = vadd.f32 0.0, %v769
    %v771 = vpop.f32.mrb[0].mxu0
    %772 = vdwg.mxu0
    %773 = vmatprep.subr.mxu0 0.0
    %v774 = vand.u32 %v653, 4294901760
    %v775 = vsub.f32 %v653, %v774
    %v776 = vand.u32 %v775, 4294901760
    %v777 = vsub.f32 %v775, %v776
    %v778 = vand.u32 %v777, 4294901760
    %779 = vmatpush1.msra.mxu0 %v778
    %780 = vmatprep.subr.mxu0 0.0
    %v781 = vand.u32 %v654, 4294901760
    %v782 = vsub.f32 %v654, %v781
    %v783 = vand.u32 %v782, 4294901760
    %v784 = vsub.f32 %v782, %v783
    %v785 = vand.u32 %v784, 4294901760
    %786 = vmatpush1.msra.mxu0 %v785
    %787 = vmatprep.subr.mxu0 0.0
    %v788 = vand.u32 %v655, 4294901760
    %v789 = vsub.f32 %v655, %v788
    %v790 = vand.u32 %v789, 4294901760
    %v791 = vsub.f32 %v789, %v790
    %v792 = vand.u32 %v791, 4294901760
    %793 = vmatpush1.msra.mxu0 %v792
    %794 = vmatprep.subr.mxu0 0.0
    %v795 = vand.u32 %v656, 4294901760
    %v796 = vsub.f32 %v656, %v795
    %v797 = vand.u32 %v796, 4294901760
    %v798 = vsub.f32 %v796, %v797
    %v799 = vand.u32 %v798, 4294901760
    %800 = vmatpush1.msra.mxu0 %v799
    %801 = vmatprep.subr.mxu0 0.0
    %v802 = vand.u32 %v657, 4294901760
    %v803 = vsub.f32 %v657, %v802
    %v804 = vand.u32 %v803, 4294901760
    %v805 = vsub.f32 %v803, %v804
    %v806 = vand.u32 %v805, 4294901760
    %807 = vmatpush1.msra.mxu0 %v806
    %808 = vmatprep.subr.mxu0 0.0
    %v809 = vand.u32 %v658, 4294901760
    %v810 = vsub.f32 %v658, %v809
    %v811 = vand.u32 %v810, 4294901760
    %v812 = vsub.f32 %v810, %v811
    %v813 = vand.u32 %v812, 4294901760
    %814 = vmatpush1.msra.mxu0 %v813
    %815 = vmatprep.subr.mxu0 0.0
    %v816 = vand.u32 %v659, 4294901760
    %v817 = vsub.f32 %v659, %v816
    %v818 = vand.u32 %v817, 4294901760
    %v819 = vsub.f32 %v817, %v818
    %v820 = vand.u32 %v819, 4294901760
    %821 = vmatpush1.msra.mxu0 %v820
    %822 = vmatprep.subr.mxu0 0.0
    %v823 = vand.u32 %v660, 4294901760
    %v824 = vsub.f32 %v660, %v823
    %v825 = vand.u32 %v824, 4294901760
    %v826 = vsub.f32 %v824, %v825
    %v827 = vand.u32 %v826, 4294901760
    %828 = vmatpush1.msra.mxu0 %v827
    %829 = vmatprep.subr.mxu0 0.0
    %830 = vmatpush1.msra.mxu0 0.0
    %831 = vmatprep.subr.mxu0 0.0
    %832 = vmatpush1.msra.mxu0 0.0
    %833 = vmatprep.subr.mxu0 0.0
    %834 = vmatpush1.msra.mxu0 0.0
    %835 = vmatprep.subr.mxu0 0.0
    %836 = vmatpush1.msra.mxu0 0.0
    %837 = vmatprep.subr.mxu0 0.0
    %838 = vmatpush1.msra.mxu0 0.0
    %839 = vmatprep.subr.mxu0 0.0
    %840 = vmatpush1.msra.mxu0 0.0
    %841 = vmatprep.subr.mxu0 0.0
    %842 = vmatpush1.msra.mxu0 0.0
    %843 = vmatprep.subr.mxu0 0.0
    %844 = vmatpush1.msra.mxu0 0.0
    %845 = vmatprep.subr.mxu0 0.0
    %846 = vmatpush1.msra.mxu0 0.0
    %847 = vmatprep.subr.mxu0 0.0
    %848 = vmatpush1.msra.mxu0 0.0
    %849 = vmatprep.subr.mxu0 0.0
    %850 = vmatpush1.msra.mxu0 0.0
    %851 = vmatprep.subr.mxu0 0.0
    %852 = vmatpush1.msra.mxu0 0.0
    %853 = vmatprep.subr.mxu0 0.0
    %854 = vmatpush1.msra.mxu0 0.0
    %855 = vmatprep.subr.mxu0 0.0
    %856 = vmatpush1.msra.mxu0 0.0
    %857 = vmatprep.subr.mxu0 0.0
    %858 = vmatpush1.msra.mxu0 0.0
    %859 = vmatprep.subr.mxu0 0.0
    %860 = vmatpush1.msra.mxu0 0.0
    %861 = vmatprep.subr.mxu0 0.0
    %862 = vmatpush1.msra.mxu0 0.0
    %863 = vmatprep.subr.mxu0 0.0
    %864 = vmatpush1.msra.mxu0 0.0
    %865 = vmatprep.subr.mxu0 0.0
    %866 = vmatpush1.msra.mxu0 0.0
    %867 = vmatprep.subr.mxu0 0.0
    %868 = vmatpush1.msra.mxu0 0.0
    %869 = vmatprep.subr.mxu0 0.0
    %870 = vmatpush1.msra.mxu0 0.0
    %871 = vmatprep.subr.mxu0 0.0
    %872 = vmatpush1.msra.mxu0 0.0
    %873 = vmatprep.subr.mxu0 0.0
    %874 = vmatpush1.msra.mxu0 0.0
    %875 = vmatprep.subr.mxu0 0.0
    %876 = vmatpush1.msra.mxu0 0.0
    %877 = vmatprep.mubr.f32.mxu0 0.0
    %v878 = vand.u32 %v662, 4294901760
    %879 = vmatmul.mubr.f32.gmra.mrb[0].mxu0 %v878
    %v880 = vpop.f32.mrb[0].mxu0
    %v881 = vadd.f32 %v750, %v880
    %v882 = vpop.f32.mrb[0].mxu0
    %883 = vmatprep.mubr.f32.mxu0 0.0
    %v884 = vand.u32 %v665, 4294901760
    %885 = vmatmul.mubr.f32.gmra.mrb[0].mxu0 %v884
    %v886 = vpop.f32.mrb[0].mxu0
    %v887 = vadd.f32 %v760, %v886
    %v888 = vpop.f32.mrb[0].mxu0
    %889 = vmatprep.mubr.f32.mxu0 0.0
    %v890 = vand.u32 %v668, 4294901760
    %891 = vmatmul.mubr.f32.gmra.mrb[0].mxu0 %v890
    %v892 = vpop.f32.mrb[0].mxu0
    %v893 = vadd.f32 %v770, %v892
    %v894 = vpop.f32.mrb[0].mxu0
    %895 = vdwg.mxu0
    %896 = vmatprep.subr.mxu0 0.0
    %v897 = vand.u32 %v653, 4294901760
    %v898 = vsub.f32 %v653, %v897
    %899 = vmatpush1.msra.mxu0 %v898
    %900 = vmatprep.subr.mxu0 0.0
    %v901 = vand.u32 %v654, 4294901760
    %v902 = vsub.f32 %v654, %v901
    %903 = vmatpush1.msra.mxu0 %v902
    %904 = vmatprep.subr.mxu0 0.0
    %v905 = vand.u32 %v655, 4294901760
    %v906 = vsub.f32 %v655, %v905
    %907 = vmatpush1.msra.mxu0 %v906
    %908 = vmatprep.subr.mxu0 0.0
    %v909 = vand.u32 %v656, 4294901760
    %v910 = vsub.f32 %v656, %v909
    %911 = vmatpush1.msra.mxu0 %v910
    %912 = vmatprep.subr.mxu0 0.0
    %v913 = vand.u32 %v657, 4294901760
    %v914 = vsub.f32 %v657, %v913
    %915 = vmatpush1.msra.mxu0 %v914
    %916 = vmatprep.subr.mxu0 0.0
    %v917 = vand.u32 %v658, 4294901760
    %v918 = vsub.f32 %v658, %v917
    %919 = vmatpush1.msra.mxu0 %v918
    %920 = vmatprep.subr.mxu0 0.0
    %v921 = vand.u32 %v659, 4294901760
    %v922 = vsub.f32 %v659, %v921
    %923 = vmatpush1.msra.mxu0 %v922
    %924 = vmatprep.subr.mxu0 0.0
    %v925 = vand.u32 %v660, 4294901760
    %v926 = vsub.f32 %v660, %v925
    %927 = vmatpush1.msra.mxu0 %v926
    %928 = vmatprep.subr.mxu0 0.0
    %929 = vmatpush1.msra.mxu0 0.0
    %930 = vmatprep.subr.mxu0 0.0
    %931 = vmatpush1.msra.mxu0 0.0
    %932 = vmatprep.subr.mxu0 0.0
    %933 = vmatpush1.msra.mxu0 0.0
    %934 = vmatprep.subr.mxu0 0.0
    %935 = vmatpush1.msra.mxu0 0.0
    %936 = vmatprep.subr.mxu0 0.0
    %937 = vmatpush1.msra.mxu0 0.0
    %938 = vmatprep.subr.mxu0 0.0
    %939 = vmatpush1.msra.mxu0 0.0
    %940 = vmatprep.subr.mxu0 0.0
    %941 = vmatpush1.msra.mxu0 0.0
    %942 = vmatprep.subr.mxu0 0.0
    %943 = vmatpush1.msra.mxu0 0.0
    %944 = vmatprep.subr.mxu0 0.0
    %945 = vmatpush1.msra.mxu0 0.0
    %946 = vmatprep.subr.mxu0 0.0
    %947 = vmatpush1.msra.mxu0 0.0
    %948 = vmatprep.subr.mxu0 0.0
    %949 = vmatpush1.msra.mxu0 0.0
    %950 = vmatprep.subr.mxu0 0.0
    %951 = vmatpush1.msra.mxu0 0.0
    %952 = vmatprep.subr.mxu0 0.0
    %953 = vmatpush1.msra.mxu0 0.0
    %954 = vmatprep.subr.mxu0 0.0
    %955 = vmatpush1.msra.mxu0 0.0
    %956 = vmatprep.subr.mxu0 0.0
    %957 = vmatpush1.msra.mxu0 0.0
    %958 = vmatprep.subr.mxu0 0.0
    %959 = vmatpush1.msra.mxu0 0.0
    %960 = vmatprep.subr.mxu0 0.0
    %961 = vmatpush1.msra.mxu0 0.0
    %962 = vmatprep.subr.mxu0 0.0
    %963 = vmatpush1.msra.mxu0 0.0
    %964 = vmatprep.subr.mxu0 0.0
    %965 = vmatpush1.msra.mxu0 0.0
    %966 = vmatprep.subr.mxu0 0.0
    %967 = vmatpush1.msra.mxu0 0.0
    %968 = vmatprep.subr.mxu0 0.0
    %969 = vmatpush1.msra.mxu0 0.0
    %970 = vmatprep.subr.mxu0 0.0
    %971 = vmatpush1.msra.mxu0 0.0
    %972 = vmatprep.subr.mxu0 0.0
    %973 = vmatpush1.msra.mxu0 0.0
    %974 = vmatprep.subr.mxu0 0.0
    %975 = vmatpush1.msra.mxu0 0.0
    %976 = vmatprep.mubr.f32.mxu0 0.0
    %v977 = vand.u32 %v662, 4294901760
    %v978 = vsub.f32 %v662, %v977
    %979 = vmatmul.mubr.f32.gmra.mrb[0].mxu0 %v978
    %v980 = vpop.f32.mrb[0].mxu0
    %v981 = vadd.f32 %v881, %v980
    %v982 = vpop.f32.mrb[0].mxu0
    %983 = vmatprep.mubr.f32.mxu0 0.0
    %v984 = vand.u32 %v665, 4294901760
    %v985 = vsub.f32 %v665, %v984
    %986 = vmatmul.mubr.f32.gmra.mrb[0].mxu0 %v985
    %v987 = vpop.f32.mrb[0].mxu0
    %v988 = vadd.f32 %v887, %v987
    %v989 = vpop.f32.mrb[0].mxu0
    %990 = vmatprep.mubr.f32.mxu0 0.0
    %v991 = vand.u32 %v668, 4294901760
    %v992 = vsub.f32 %v668, %v991
    %993 = vmatmul.mubr.f32.gmra.mrb[0].mxu0 %v992
    %v994 = vpop.f32.mrb[0].mxu0
    %v995 = vadd.f32 %v893, %v994
    %v996 = vpop.f32.mrb[0].mxu0
    %997 = vdwg.mxu0
    %998 = vmatprep.subr.mxu0 0.0
    %v999 = vand.u32 %v653, 4294901760
    %1000 = vmatpush1.msra.mxu0 %v999
    %1001 = vmatprep.subr.mxu0 0.0
    %v1002 = vand.u32 %v654, 4294901760
    %1003 = vmatpush1.msra.mxu0 %v1002
    %1004 = vmatprep.subr.mxu0 0.0
    %v1005 = vand.u32 %v655, 4294901760
    %1006 = vmatpush1.msra.mxu0 %v1005
    %1007 = vmatprep.subr.mxu0 0.0
    %v1008 = vand.u32 %v656, 4294901760
    %1009 = vmatpush1.msra.mxu0 %v1008
    %1010 = vmatprep.subr.mxu0 0.0
    %v1011 = vand.u32 %v657, 4294901760
    %1012 = vmatpush1.msra.mxu0 %v1011
    %1013 = vmatprep.subr.mxu0 0.0
    %v1014 = vand.u32 %v658, 4294901760
    %1015 = vmatpush1.msra.mxu0 %v1014
    %1016 = vmatprep.subr.mxu0 0.0
    %v1017 = vand.u32 %v659, 4294901760
    %1018 = vmatpush1.msra.mxu0 %v1017
    %1019 = vmatprep.subr.mxu0 0.0
    %v1020 = vand.u32 %v660, 4294901760
    %1021 = vmatpush1.msra.mxu0 %v1020
    %1022 = vmatprep.subr.mxu0 0.0
    %1023 = vmatpush1.msra.mxu0 0.0
    %1024 = vmatprep.subr.mxu0 0.0
    %1025 = vmatpush1.msra.mxu0 0.0
    %1026 = vmatprep.subr.mxu0 0.0
    %1027 = vmatpush1.msra.mxu0 0.0
    %1028 = vmatprep.subr.mxu0 0.0
    %1029 = vmatpush1.msra.mxu0 0.0
    %1030 = vmatprep.subr.mxu0 0.0
    %1031 = vmatpush1.msra.mxu0 0.0
    %1032 = vmatprep.subr.mxu0 0.0
    %1033 = vmatpush1.msra.mxu0 0.0
    %1034 = vmatprep.subr.mxu0 0.0
    %1035 = vmatpush1.msra.mxu0 0.0
    %1036 = vmatprep.subr.mxu0 0.0
    %1037 = vmatpush1.msra.mxu0 0.0
    %1038 = vmatprep.subr.mxu0 0.0
    %1039 = vmatpush1.msra.mxu0 0.0
    %1040 = vmatprep.subr.mxu0 0.0
    %1041 = vmatpush1.msra.mxu0 0.0
    %1042 = vmatprep.subr.mxu0 0.0
    %1043 = vmatpush1.msra.mxu0 0.0
    %1044 = vmatprep.subr.mxu0 0.0
    %1045 = vmatpush1.msra.mxu0 0.0
    %1046 = vmatprep.subr.mxu0 0.0
    %1047 = vmatpush1.msra.mxu0 0.0
    %1048 = vmatprep.subr.mxu0 0.0
    %1049 = vmatpush1.msra.mxu0 0.0
    %1050 = vmatprep.subr.mxu0 0.0
    %1051 = vmatpush1.msra.mxu0 0.0
    %1052 = vmatprep.subr.mxu0 0.0
    %1053 = vmatpush1.msra.mxu0 0.0
    %1054 = vmatprep.subr.mxu0 0.0
    %1055 = vmatpush1.msra.mxu0 0.0
    %1056 = vmatprep.subr.mxu0 0.0
    %1057 = vmatpush1.msra.mxu0 0.0
    %1058 = vmatprep.subr.mxu0 0.0
    %1059 = vmatpush1.msra.mxu0 0.0
    %1060 = vmatprep.subr.mxu0 0.0
    %1061 = vmatpush1.msra.mxu0 0.0
    %1062 = vmatprep.subr.mxu0 0.0
    %1063 = vmatpush1.msra.mxu0 0.0
    %1064 = vmatprep.subr.mxu0 0.0
    %1065 = vmatpush1.msra.mxu0 0.0
    %1066 = vmatprep.subr.mxu0 0.0
    %1067 = vmatpush1.msra.mxu0 0.0
    %1068 = vmatprep.subr.mxu0 0.0
    %1069 = vmatpush1.msra.mxu0 0.0
    %1070 = vmatprep.mubr.f32.mxu0 0.0
    %v1071 = vand.u32 %v662, 4294901760
    %v1072 = vsub.f32 %v662, %v1071
    %v1073 = vand.u32 %v1072, 4294901760
    %1074 = vmatmul.mubr.f32.gmra.mrb[0].mxu0 %v1073
    %v1075 = vpop.f32.mrb[0].mxu0
    %v1076 = vadd.f32 %v981, %v1075
    %v1077 = vpop.f32.mrb[0].mxu0
    %1078 = vmatprep.mubr.f32.mxu0 0.0
    %v1079 = vand.u32 %v665, 4294901760
    %v1080 = vsub.f32 %v665, %v1079
    %v1081 = vand.u32 %v1080, 4294901760
    %1082 = vmatmul.mubr.f32.gmra.mrb[0].mxu0 %v1081
    %v1083 = vpop.f32.mrb[0].mxu0
    %v1084 = vadd.f32 %v988, %v1083
    %v1085 = vpop.f32.mrb[0].mxu0
    %1086 = vmatprep.mubr.f32.mxu0 0.0
    %v1087 = vand.u32 %v668, 4294901760
    %v1088 = vsub.f32 %v668, %v1087
    %v1089 = vand.u32 %v1088, 4294901760
    %1090 = vmatmul.mubr.f32.gmra.mrb[0].mxu0 %v1089
    %v1091 = vpop.f32.mrb[0].mxu0
    %v1092 = vadd.f32 %v995, %v1091
    %v1093 = vpop.f32.mrb[0].mxu0
    %1094 = vdwg.mxu0
    %1095 = vmatprep.subr.mxu0 0.0
    %v1096 = vand.u32 %v653, 4294901760
    %v1097 = vsub.f32 %v653, %v1096
    %v1098 = vand.u32 %v1097, 4294901760
    %1099 = vmatpush1.msra.mxu0 %v1098
    %1100 = vmatprep.subr.mxu0 0.0
    %v1101 = vand.u32 %v654, 4294901760
    %v1102 = vsub.f32 %v654, %v1101
    %v1103 = vand.u32 %v1102, 4294901760
    %1104 = vmatpush1.msra.mxu0 %v1103
    %1105 = vmatprep.subr.mxu0 0.0
    %v1106 = vand.u32 %v655, 4294901760
    %v1107 = vsub.f32 %v655, %v1106
    %v1108 = vand.u32 %v1107, 4294901760
    %1109 = vmatpush1.msra.mxu0 %v1108
    %1110 = vmatprep.subr.mxu0 0.0
    %v1111 = vand.u32 %v656, 4294901760
    %v1112 = vsub.f32 %v656, %v1111
    %v1113 = vand.u32 %v1112, 4294901760
    %1114 = vmatpush1.msra.mxu0 %v1113
    %1115 = vmatprep.subr.mxu0 0.0
    %v1116 = vand.u32 %v657, 4294901760
    %v1117 = vsub.f32 %v657, %v1116
    %v1118 = vand.u32 %v1117, 4294901760
    %1119 = vmatpush1.msra.mxu0 %v1118
    %1120 = vmatprep.subr.mxu0 0.0
    %v1121 = vand.u32 %v658, 4294901760
    %v1122 = vsub.f32 %v658, %v1121
    %v1123 = vand.u32 %v1122, 4294901760
    %1124 = vmatpush1.msra.mxu0 %v1123
    %1125 = vmatprep.subr.mxu0 0.0
    %v1126 = vand.u32 %v659, 4294901760
    %v1127 = vsub.f32 %v659, %v1126
    %v1128 = vand.u32 %v1127, 4294901760
    %1129 = vmatpush1.msra.mxu0 %v1128
    %1130 = vmatprep.subr.mxu0 0.0
    %v1131 = vand.u32 %v660, 4294901760
    %v1132 = vsub.f32 %v660, %v1131
    %v1133 = vand.u32 %v1132, 4294901760
    %1134 = vmatpush1.msra.mxu0 %v1133
    %1135 = vmatprep.subr.mxu0 0.0
    %1136 = vmatpush1.msra.mxu0 0.0
    %1137 = vmatprep.subr.mxu0 0.0
    %1138 = vmatpush1.msra.mxu0 0.0
    %1139 = vmatprep.subr.mxu0 0.0
    %1140 = vmatpush1.msra.mxu0 0.0
    %1141 = vmatprep.subr.mxu0 0.0
    %1142 = vmatpush1.msra.mxu0 0.0
    %1143 = vmatprep.subr.mxu0 0.0
    %1144 = vmatpush1.msra.mxu0 0.0
    %1145 = vmatprep.subr.mxu0 0.0
    %1146 = vmatpush1.msra.mxu0 0.0
    %1147 = vmatprep.subr.mxu0 0.0
    %1148 = vmatpush1.msra.mxu0 0.0
    %1149 = vmatprep.subr.mxu0 0.0
    %1150 = vmatpush1.msra.mxu0 0.0
    %1151 = vmatprep.subr.mxu0 0.0
    %1152 = vmatpush1.msra.mxu0 0.0
    %1153 = vmatprep.subr.mxu0 0.0
    %1154 = vmatpush1.msra.mxu0 0.0
    %1155 = vmatprep.subr.mxu0 0.0
    %1156 = vmatpush1.msra.mxu0 0.0
    %1157 = vmatprep.subr.mxu0 0.0
    %1158 = vmatpush1.msra.mxu0 0.0
    %1159 = vmatprep.subr.mxu0 0.0
    %1160 = vmatpush1.msra.mxu0 0.0
    %1161 = vmatprep.subr.mxu0 0.0
    %1162 = vmatpush1.msra.mxu0 0.0
    %1163 = vmatprep.subr.mxu0 0.0
    %1164 = vmatpush1.msra.mxu0 0.0
    %1165 = vmatprep.subr.mxu0 0.0
    %1166 = vmatpush1.msra.mxu0 0.0
    %1167 = vmatprep.subr.mxu0 0.0
    %1168 = vmatpush1.msra.mxu0 0.0
    %1169 = vmatprep.subr.mxu0 0.0
    %1170 = vmatpush1.msra.mxu0 0.0
    %1171 = vmatprep.subr.mxu0 0.0
    %1172 = vmatpush1.msra.mxu0 0.0
    %1173 = vmatprep.subr.mxu0 0.0
    %1174 = vmatpush1.msra.mxu0 0.0
    %1175 = vmatprep.subr.mxu0 0.0
    %1176 = vmatpush1.msra.mxu0 0.0
    %1177 = vmatprep.subr.mxu0 0.0
    %1178 = vmatpush1.msra.mxu0 0.0
    %1179 = vmatprep.subr.mxu0 0.0
    %1180 = vmatpush1.msra.mxu0 0.0
    %1181 = vmatprep.subr.mxu0 0.0
    %1182 = vmatpush1.msra.mxu0 0.0
    %1183 = vmatprep.mubr.f32.mxu0 0.0
    %v1184 = vand.u32 %v662, 4294901760
    %1185 = vmatmul.mubr.f32.gmra.mrb[0].mxu0 %v1184
    %v1186 = vpop.f32.mrb[0].mxu0
    %v1187 = vadd.f32 %v1076, %v1186
    %v1188 = vpop.f32.mrb[0].mxu0
    %1189 = vmatprep.mubr.f32.mxu0 0.0
    %v1190 = vand.u32 %v665, 4294901760
    %1191 = vmatmul.mubr.f32.gmra.mrb[0].mxu0 %v1190
    %v1192 = vpop.f32.mrb[0].mxu0
    %v1193 = vadd.f32 %v1084, %v1192
    %v1194 = vpop.f32.mrb[0].mxu0
    %1195 = vmatprep.mubr.f32.mxu0 0.0
    %v1196 = vand.u32 %v668, 4294901760
    %1197 = vmatmul.mubr.f32.gmra.mrb[0].mxu0 %v1196
    %v1198 = vpop.f32.mrb[0].mxu0
    %v1199 = vadd.f32 %v1092, %v1198
    %v1200 = vpop.f32.mrb[0].mxu0
    %1201 = vdwg.mxu0
    %1202 = vmatprep.subr.mxu0 0.0
    %v1203 = vand.u32 %v653, 4294901760
    %1204 = vmatpush1.msra.mxu0 %v1203
    %1205 = vmatprep.subr.mxu0 0.0
    %v1206 = vand.u32 %v654, 4294901760
    %1207 = vmatpush1.msra.mxu0 %v1206
    %1208 = vmatprep.subr.mxu0 0.0
    %v1209 = vand.u32 %v655, 4294901760
    %1210 = vmatpush1.msra.mxu0 %v1209
    %1211 = vmatprep.subr.mxu0 0.0
    %v1212 = vand.u32 %v656, 4294901760
    %1213 = vmatpush1.msra.mxu0 %v1212
    %1214 = vmatprep.subr.mxu0 0.0
    %v1215 = vand.u32 %v657, 4294901760
    %1216 = vmatpush1.msra.mxu0 %v1215
    %1217 = vmatprep.subr.mxu0 0.0
    %v1218 = vand.u32 %v658, 4294901760
    %1219 = vmatpush1.msra.mxu0 %v1218
    %1220 = vmatprep.subr.mxu0 0.0
    %v1221 = vand.u32 %v659, 4294901760
    %1222 = vmatpush1.msra.mxu0 %v1221
    %1223 = vmatprep.subr.mxu0 0.0
    %v1224 = vand.u32 %v660, 4294901760
    %1225 = vmatpush1.msra.mxu0 %v1224
    %1226 = vmatprep.subr.mxu0 0.0
    %1227 = vmatpush1.msra.mxu0 0.0
    %1228 = vmatprep.subr.mxu0 0.0
    %1229 = vmatpush1.msra.mxu0 0.0
    %1230 = vmatprep.subr.mxu0 0.0
    %1231 = vmatpush1.msra.mxu0 0.0
    %1232 = vmatprep.subr.mxu0 0.0
    %1233 = vmatpush1.msra.mxu0 0.0
    %1234 = vmatprep.subr.mxu0 0.0
    %1235 = vmatpush1.msra.mxu0 0.0
    %1236 = vmatprep.subr.mxu0 0.0
    %1237 = vmatpush1.msra.mxu0 0.0
    %1238 = vmatprep.subr.mxu0 0.0
    %1239 = vmatpush1.msra.mxu0 0.0
    %1240 = vmatprep.subr.mxu0 0.0
    %1241 = vmatpush1.msra.mxu0 0.0
    %1242 = vmatprep.subr.mxu0 0.0
    %1243 = vmatpush1.msra.mxu0 0.0
    %1244 = vmatprep.subr.mxu0 0.0
    %1245 = vmatpush1.msra.mxu0 0.0
    %1246 = vmatprep.subr.mxu0 0.0
    %1247 = vmatpush1.msra.mxu0 0.0
    %1248 = vmatprep.subr.mxu0 0.0
    %1249 = vmatpush1.msra.mxu0 0.0
    %1250 = vmatprep.subr.mxu0 0.0
    %1251 = vmatpush1.msra.mxu0 0.0
    %1252 = vmatprep.subr.mxu0 0.0
    %1253 = vmatpush1.msra.mxu0 0.0
    %1254 = vmatprep.subr.mxu0 0.0
    %1255 = vmatpush1.msra.mxu0 0.0
    %1256 = vmatprep.subr.mxu0 0.0
    %1257 = vmatpush1.msra.mxu0 0.0
    %1258 = vmatprep.subr.mxu0 0.0
    %1259 = vmatpush1.msra.mxu0 0.0
    %1260 = vmatprep.subr.mxu0 0.0
    %1261 = vmatpush1.msra.mxu0 0.0
    %1262 = vmatprep.subr.mxu0 0.0
    %1263 = vmatpush1.msra.mxu0 0.0
    %1264 = vmatprep.subr.mxu0 0.0
    %1265 = vmatpush1.msra.mxu0 0.0
    %1266 = vmatprep.subr.mxu0 0.0
    %1267 = vmatpush1.msra.mxu0 0.0
    %1268 = vmatprep.subr.mxu0 0.0
    %1269 = vmatpush1.msra.mxu0 0.0
    %1270 = vmatprep.subr.mxu0 0.0
    %1271 = vmatpush1.msra.mxu0 0.0
    %1272 = vmatprep.subr.mxu0 0.0
    %1273 = vmatpush1.msra.mxu0 0.0
    %1274 = vmatprep.mubr.f32.mxu0 0.0
    %v1275 = vand.u32 %v662, 4294901760
    %1276 = vmatmul.mubr.f32.gmra.mrb[0].mxu0 %v1275
    %v1277 = vpop.f32.mrb[0].mxu0
    %v1278 = vadd.f32 %v1187, %v1277
    %v1279 = vpop.f32.mrb[0].mxu0
    %1280 = vmatprep.mubr.f32.mxu0 0.0
    %v1281 = vand.u32 %v665, 4294901760
    %1282 = vmatmul.mubr.f32.gmra.mrb[0].mxu0 %v1281
    %v1283 = vpop.f32.mrb[0].mxu0
    %v1284 = vadd.f32 %v1193, %v1283
    %v1285 = vpop.f32.mrb[0].mxu0
    %1286 = vmatprep.mubr.f32.mxu0 0.0
    %v1287 = vand.u32 %v668, 4294901760
    %1288 = vmatmul.mubr.f32.gmra.mrb[0].mxu0 %v1287
    %v1289 = vpop.f32.mrb[0].mxu0
    %v1290 = vadd.f32 %v1199, %v1289
    %v1291 = vpop.f32.mrb[0].mxu0
    %1292 = vdwg.mxu0
    %1293 = vmatprep.subr.mxu0 0.0
    %v1294 = vand.u32 %v629, 4294901760
    %1295 = vmatpush1.xpose.msra.mxu0 %v1294
    %1296 = vmatprep.subr.mxu0 0.0
    %1297 = vmatpush1.xpose.msra.mxu0 0.0
    %1298 = vmatprep.subr.mxu0 0.0
    %1299 = vmatpush1.xpose.msra.mxu0 0.0
    %1300 = vmatprep.subr.mxu0 0.0
    %1301 = vmatpush1.xpose.msra.mxu0 0.0
    %1302 = vmatprep.subr.mxu0 0.0
    %1303 = vmatpush1.xpose.msra.mxu0 0.0
    %1304 = vmatprep.subr.mxu0 0.0
    %1305 = vmatpush1.xpose.msra.mxu0 0.0
    %1306 = vmatprep.subr.mxu0 0.0
    %1307 = vmatpush1.xpose.msra.mxu0 0.0
    %1308 = vmatprep.subr.mxu0 0.0
    %1309 = vmatpush1.xpose.msra.mxu0 0.0
    %1310 = vmatprep.subr.mxu0 0.0
    %1311 = vmatpush1.xpose.msra.mxu0 0.0
    %1312 = vmatprep.subr.mxu0 0.0
    %1313 = vmatpush1.xpose.msra.mxu0 0.0
    %1314 = vmatprep.subr.mxu0 0.0
    %1315 = vmatpush1.xpose.msra.mxu0 0.0
    %1316 = vmatprep.subr.mxu0 0.0
    %1317 = vmatpush1.xpose.msra.mxu0 0.0
    %1318 = vmatprep.subr.mxu0 0.0
    %1319 = vmatpush1.xpose.msra.mxu0 0.0
    %1320 = vmatprep.subr.mxu0 0.0
    %1321 = vmatpush1.xpose.msra.mxu0 0.0
    %1322 = vmatprep.subr.mxu0 0.0
    %1323 = vmatpush1.xpose.msra.mxu0 0.0
    %1324 = vmatprep.subr.mxu0 0.0
    %1325 = vmatpush1.xpose.msra.mxu0 0.0
    %1326 = vmatprep.subr.mxu0 0.0
    %1327 = vmatpush1.xpose.msra.mxu0 0.0
    %1328 = vmatprep.subr.mxu0 0.0
    %1329 = vmatpush1.xpose.msra.mxu0 0.0
    %1330 = vmatprep.subr.mxu0 0.0
    %1331 = vmatpush1.xpose.msra.mxu0 0.0
    %1332 = vmatprep.subr.mxu0 0.0
    %1333 = vmatpush1.xpose.msra.mxu0 0.0
    %1334 = vmatprep.subr.mxu0 0.0
    %1335 = vmatpush1.xpose.msra.mxu0 0.0
    %1336 = vmatprep.subr.mxu0 0.0
    %1337 = vmatpush1.xpose.msra.mxu0 0.0
    %1338 = vmatprep.subr.mxu0 0.0
    %1339 = vmatpush1.xpose.msra.mxu0 0.0
    %1340 = vmatprep.subr.mxu0 0.0
    %1341 = vmatpush1.xpose.msra.mxu0 0.0
    %1342 = vmatprep.subr.mxu0 0.0
    %1343 = vmatpush1.xpose.msra.mxu0 0.0
    %1344 = vmatprep.subr.mxu0 0.0
    %1345 = vmatpush1.xpose.msra.mxu0 0.0
    %1346 = vmatprep.subr.mxu0 0.0
    %1347 = vmatpush1.xpose.msra.mxu0 0.0
    %1348 = vmatprep.subr.mxu0 0.0
    %1349 = vmatpush1.xpose.msra.mxu0 0.0
    %1350 = vmatprep.subr.mxu0 0.0
    %1351 = vmatpush1.xpose.msra.mxu0 0.0
    %1352 = vmatprep.subr.mxu0 0.0
    %1353 = vmatpush1.xpose.msra.mxu0 0.0
    %1354 = vmatprep.subr.mxu0 0.0
    %1355 = vmatpush1.xpose.msra.mxu0 0.0
    %1356 = vmatprep.subr.mxu0 0.0
    %1357 = vmatpush1.xpose.msra.mxu0 0.0
    %1358 = vmatprep.mubr.f32.mxu0 0.0
    %v1359 = vand.u32 %v1278, 4294901760
    %v1360 = vsub.f32 %v1278, %v1359
    %v1361 = vand.u32 %v1360, 4294901760
    %v1362 = vsub.f32 %v1360, %v1361
    %v1363 = vand.u32 %v1362, 4294901760
    %1364 = vmatmul.mubr.f32.gmra.mrb[0].mxu0 %v1363
    %v1365 = vpop.f32.mrb[0].mxu0
    %v1366 = vadd.f32 0.0, %v1365
    %v1367 = vpop.f32.mrb[0].mxu0
    %1368 = vmatprep.mubr.f32.mxu0 0.0
    %v1369 = vand.u32 %v1284, 4294901760
    %v1370 = vsub.f32 %v1284, %v1369
    %v1371 = vand.u32 %v1370, 4294901760
    %v1372 = vsub.f32 %v1370, %v1371
    %v1373 = vand.u32 %v1372, 4294901760
    %1374 = vmatmul.mubr.f32.gmra.mrb[0].mxu0 %v1373
    %v1375 = vpop.f32.mrb[0].mxu0
    %v1376 = vadd.f32 0.0, %v1375
    %v1377 = vpop.f32.mrb[0].mxu0
    %1378 = vmatprep.mubr.f32.mxu0 0.0
    %v1379 = vand.u32 %v1290, 4294901760
    %v1380 = vsub.f32 %v1290, %v1379
    %v1381 = vand.u32 %v1380, 4294901760
    %v1382 = vsub.f32 %v1380, %v1381
    %v1383 = vand.u32 %v1382, 4294901760
    %1384 = vmatmul.mubr.f32.gmra.mrb[0].mxu0 %v1383
    %v1385 = vpop.f32.mrb[0].mxu0
    %v1386 = vadd.f32 0.0, %v1385
    %v1387 = vpop.f32.mrb[0].mxu0
    %1388 = vdwg.mxu0
    %1389 = vmatprep.subr.mxu0 0.0
    %v1390 = vand.u32 %v629, 4294901760
    %v1391 = vsub.f32 %v629, %v1390
    %v1392 = vand.u32 %v1391, 4294901760
    %v1393 = vsub.f32 %v1391, %v1392
    %v1394 = vand.u32 %v1393, 4294901760
    %1395 = vmatpush1.xpose.msra.mxu0 %v1394
    %1396 = vmatprep.subr.mxu0 0.0
    %1397 = vmatpush1.xpose.msra.mxu0 0.0
    %1398 = vmatprep.subr.mxu0 0.0
    %1399 = vmatpush1.xpose.msra.mxu0 0.0
    %1400 = vmatprep.subr.mxu0 0.0
    %1401 = vmatpush1.xpose.msra.mxu0 0.0
    %1402 = vmatprep.subr.mxu0 0.0
    %1403 = vmatpush1.xpose.msra.mxu0 0.0
    %1404 = vmatprep.subr.mxu0 0.0
    %1405 = vmatpush1.xpose.msra.mxu0 0.0
    %1406 = vmatprep.subr.mxu0 0.0
    %1407 = vmatpush1.xpose.msra.mxu0 0.0
    %1408 = vmatprep.subr.mxu0 0.0
    %1409 = vmatpush1.xpose.msra.mxu0 0.0
    %1410 = vmatprep.subr.mxu0 0.0
    %1411 = vmatpush1.xpose.msra.mxu0 0.0
    %1412 = vmatprep.subr.mxu0 0.0
    %1413 = vmatpush1.xpose.msra.mxu0 0.0
    %1414 = vmatprep.subr.mxu0 0.0
    %1415 = vmatpush1.xpose.msra.mxu0 0.0
    %1416 = vmatprep.subr.mxu0 0.0
    %1417 = vmatpush1.xpose.msra.mxu0 0.0
    %1418 = vmatprep.subr.mxu0 0.0
    %1419 = vmatpush1.xpose.msra.mxu0 0.0
    %1420 = vmatprep.subr.mxu0 0.0
    %1421 = vmatpush1.xpose.msra.mxu0 0.0
    %1422 = vmatprep.subr.mxu0 0.0
    %1423 = vmatpush1.xpose.msra.mxu0 0.0
    %1424 = vmatprep.subr.mxu0 0.0
    %1425 = vmatpush1.xpose.msra.mxu0 0.0
    %1426 = vmatprep.subr.mxu0 0.0
    %1427 = vmatpush1.xpose.msra.mxu0 0.0
    %1428 = vmatprep.subr.mxu0 0.0
    %1429 = vmatpush1.xpose.msra.mxu0 0.0
    %1430 = vmatprep.subr.mxu0 0.0
    %1431 = vmatpush1.xpose.msra.mxu0 0.0
    %1432 = vmatprep.subr.mxu0 0.0
    %1433 = vmatpush1.xpose.msra.mxu0 0.0
    %1434 = vmatprep.subr.mxu0 0.0
    %1435 = vmatpush1.xpose.msra.mxu0 0.0
    %1436 = vmatprep.subr.mxu0 0.0
    %1437 = vmatpush1.xpose.msra.mxu0 0.0
    %1438 = vmatprep.subr.mxu0 0.0
    %1439 = vmatpush1.xpose.msra.mxu0 0.0
    %1440 = vmatprep.subr.mxu0 0.0
    %1441 = vmatpush1.xpose.msra.mxu0 0.0
    %1442 = vmatprep.subr.mxu0 0.0
    %1443 = vmatpush1.xpose.msra.mxu0 0.0
    %1444 = vmatprep.subr.mxu0 0.0
    %1445 = vmatpush1.xpose.msra.mxu0 0.0
    %1446 = vmatprep.subr.mxu0 0.0
    %1447 = vmatpush1.xpose.msra.mxu0 0.0
    %1448 = vmatprep.subr.mxu0 0.0
    %1449 = vmatpush1.xpose.msra.mxu0 0.0
    %1450 = vmatprep.subr.mxu0 0.0
    %1451 = vmatpush1.xpose.msra.mxu0 0.0
    %1452 = vmatprep.subr.mxu0 0.0
    %1453 = vmatpush1.xpose.msra.mxu0 0.0
    %1454 = vmatprep.subr.mxu0 0.0
    %1455 = vmatpush1.xpose.msra.mxu0 0.0
    %1456 = vmatprep.subr.mxu0 0.0
    %1457 = vmatpush1.xpose.msra.mxu0 0.0
    %1458 = vmatprep.mubr.f32.mxu0 0.0
    %v1459 = vand.u32 %v1278, 4294901760
    %1460 = vmatmul.mubr.f32.gmra.mrb[0].mxu0 %v1459
    %v1461 = vpop.f32.mrb[0].mxu0
    %v1462 = vadd.f32 %v1366, %v1461
    %v1463 = vpop.f32.mrb[0].mxu0
    %1464 = vmatprep.mubr.f32.mxu0 0.0
    %v1465 = vand.u32 %v1284, 4294901760
    %1466 = vmatmul.mubr.f32.gmra.mrb[0].mxu0 %v1465
    %v1467 = vpop.f32.mrb[0].mxu0
    %v1468 = vadd.f32 %v1376, %v1467
    %v1469 = vpop.f32.mrb[0].mxu0
    %1470 = vmatprep.mubr.f32.mxu0 0.0
    %v1471 = vand.u32 %v1290, 4294901760
    %1472 = vmatmul.mubr.f32.gmra.mrb[0].mxu0 %v1471
    %v1473 = vpop.f32.mrb[0].mxu0
    %v1474 = vadd.f32 %v1386, %v1473
    %v1475 = vpop.f32.mrb[0].mxu0
    %1476 = vdwg.mxu0
    %1477 = vmatprep.subr.mxu0 0.0
    %v1478 = vand.u32 %v629, 4294901760
    %v1479 = vsub.f32 %v629, %v1478
    %1480 = vmatpush1.xpose.msra.mxu0 %v1479
    %1481 = vmatprep.subr.mxu0 0.0
    %1482 = vmatpush1.xpose.msra.mxu0 0.0
    %1483 = vmatprep.subr.mxu0 0.0
    %1484 = vmatpush1.xpose.msra.mxu0 0.0
    %1485 = vmatprep.subr.mxu0 0.0
    %1486 = vmatpush1.xpose.msra.mxu0 0.0
    %1487 = vmatprep.subr.mxu0 0.0
    %1488 = vmatpush1.xpose.msra.mxu0 0.0
    %1489 = vmatprep.subr.mxu0 0.0
    %1490 = vmatpush1.xpose.msra.mxu0 0.0
    %1491 = vmatprep.subr.mxu0 0.0
    %1492 = vmatpush1.xpose.msra.mxu0 0.0
    %1493 = vmatprep.subr.mxu0 0.0
    %1494 = vmatpush1.xpose.msra.mxu0 0.0
    %1495 = vmatprep.subr.mxu0 0.0
    %1496 = vmatpush1.xpose.msra.mxu0 0.0
    %1497 = vmatprep.subr.mxu0 0.0
    %1498 = vmatpush1.xpose.msra.mxu0 0.0
    %1499 = vmatprep.subr.mxu0 0.0
    %1500 = vmatpush1.xpose.msra.mxu0 0.0
    %1501 = vmatprep.subr.mxu0 0.0
    %1502 = vmatpush1.xpose.msra.mxu0 0.0
    %1503 = vmatprep.subr.mxu0 0.0
    %1504 = vmatpush1.xpose.msra.mxu0 0.0
    %1505 = vmatprep.subr.mxu0 0.0
    %1506 = vmatpush1.xpose.msra.mxu0 0.0
    %1507 = vmatprep.subr.mxu0 0.0
    %1508 = vmatpush1.xpose.msra.mxu0 0.0
    %1509 = vmatprep.subr.mxu0 0.0
    %1510 = vmatpush1.xpose.msra.mxu0 0.0
    %1511 = vmatprep.subr.mxu0 0.0
    %1512 = vmatpush1.xpose.msra.mxu0 0.0
    %1513 = vmatprep.subr.mxu0 0.0
    %1514 = vmatpush1.xpose.msra.mxu0 0.0
    %1515 = vmatprep.subr.mxu0 0.0
    %1516 = vmatpush1.xpose.msra.mxu0 0.0
    %1517 = vmatprep.subr.mxu0 0.0
    %1518 = vmatpush1.xpose.msra.mxu0 0.0
    %1519 = vmatprep.subr.mxu0 0.0
    %1520 = vmatpush1.xpose.msra.mxu0 0.0
    %1521 = vmatprep.subr.mxu0 0.0
    %1522 = vmatpush1.xpose.msra.mxu0 0.0
    %1523 = vmatprep.subr.mxu0 0.0
    %1524 = vmatpush1.xpose.msra.mxu0 0.0
    %1525 = vmatprep.subr.mxu0 0.0
    %1526 = vmatpush1.xpose.msra.mxu0 0.0
    %1527 = vmatprep.subr.mxu0 0.0
    %1528 = vmatpush1.xpose.msra.mxu0 0.0
    %1529 = vmatprep.subr.mxu0 0.0
    %1530 = vmatpush1.xpose.msra.mxu0 0.0
    %1531 = vmatprep.subr.mxu0 0.0
    %1532 = vmatpush1.xpose.msra.mxu0 0.0
    %1533 = vmatprep.subr.mxu0 0.0
    %1534 = vmatpush1.xpose.msra.mxu0 0.0
    %1535 = vmatprep.subr.mxu0 0.0
    %1536 = vmatpush1.xpose.msra.mxu0 0.0
    %1537 = vmatprep.subr.mxu0 0.0
    %1538 = vmatpush1.xpose.msra.mxu0 0.0
    %1539 = vmatprep.subr.mxu0 0.0
    %1540 = vmatpush1.xpose.msra.mxu0 0.0
    %1541 = vmatprep.subr.mxu0 0.0
    %1542 = vmatpush1.xpose.msra.mxu0 0.0
    %1543 = vmatprep.mubr.f32.mxu0 0.0
    %v1544 = vand.u32 %v1278, 4294901760
    %v1545 = vsub.f32 %v1278, %v1544
    %1546 = vmatmul.mubr.f32.gmra.mrb[0].mxu0 %v1545
    %v1547 = vpop.f32.mrb[0].mxu0
    %v1548 = vadd.f32 %v1462, %v1547
    %v1549 = vpop.f32.mrb[0].mxu0
    %1550 = vmatprep.mubr.f32.mxu0 0.0
    %v1551 = vand.u32 %v1284, 4294901760
    %v1552 = vsub.f32 %v1284, %v1551
    %1553 = vmatmul.mubr.f32.gmra.mrb[0].mxu0 %v1552
    %v1554 = vpop.f32.mrb[0].mxu0
    %v1555 = vadd.f32 %v1468, %v1554
    %v1556 = vpop.f32.mrb[0].mxu0
    %1557 = vmatprep.mubr.f32.mxu0 0.0
    %v1558 = vand.u32 %v1290, 4294901760
    %v1559 = vsub.f32 %v1290, %v1558
    %1560 = vmatmul.mubr.f32.gmra.mrb[0].mxu0 %v1559
    %v1561 = vpop.f32.mrb[0].mxu0
    %v1562 = vadd.f32 %v1474, %v1561
    %v1563 = vpop.f32.mrb[0].mxu0
    %1564 = vdwg.mxu0
    %1565 = vmatprep.subr.mxu0 0.0
    %v1566 = vand.u32 %v629, 4294901760
    %1567 = vmatpush1.xpose.msra.mxu0 %v1566
    %1568 = vmatprep.subr.mxu0 0.0
    %1569 = vmatpush1.xpose.msra.mxu0 0.0
    %1570 = vmatprep.subr.mxu0 0.0
    %1571 = vmatpush1.xpose.msra.mxu0 0.0
    %1572 = vmatprep.subr.mxu0 0.0
    %1573 = vmatpush1.xpose.msra.mxu0 0.0
    %1574 = vmatprep.subr.mxu0 0.0
    %1575 = vmatpush1.xpose.msra.mxu0 0.0
    %1576 = vmatprep.subr.mxu0 0.0
    %1577 = vmatpush1.xpose.msra.mxu0 0.0
    %1578 = vmatprep.subr.mxu0 0.0
    %1579 = vmatpush1.xpose.msra.mxu0 0.0
    %1580 = vmatprep.subr.mxu0 0.0
    %1581 = vmatpush1.xpose.msra.mxu0 0.0
    %1582 = vmatprep.subr.mxu0 0.0
    %1583 = vmatpush1.xpose.msra.mxu0 0.0
    %1584 = vmatprep.subr.mxu0 0.0
    %1585 = vmatpush1.xpose.msra.mxu0 0.0
    %1586 = vmatprep.subr.mxu0 0.0
    %1587 = vmatpush1.xpose.msra.mxu0 0.0
    %1588 = vmatprep.subr.mxu0 0.0
    %1589 = vmatpush1.xpose.msra.mxu0 0.0
    %1590 = vmatprep.subr.mxu0 0.0
    %1591 = vmatpush1.xpose.msra.mxu0 0.0
    %1592 = vmatprep.subr.mxu0 0.0
    %1593 = vmatpush1.xpose.msra.mxu0 0.0
    %1594 = vmatprep.subr.mxu0 0.0
    %1595 = vmatpush1.xpose.msra.mxu0 0.0
    %1596 = vmatprep.subr.mxu0 0.0
    %1597 = vmatpush1.xpose.msra.mxu0 0.0
    %1598 = vmatprep.subr.mxu0 0.0
    %1599 = vmatpush1.xpose.msra.mxu0 0.0
    %1600 = vmatprep.subr.mxu0 0.0
    %1601 = vmatpush1.xpose.msra.mxu0 0.0
    %1602 = vmatprep.subr.mxu0 0.0
    %1603 = vmatpush1.xpose.msra.mxu0 0.0
    %1604 = vmatprep.subr.mxu0 0.0
    %1605 = vmatpush1.xpose.msra.mxu0 0.0
    %1606 = vmatprep.subr.mxu0 0.0
    %1607 = vmatpush1.xpose.msra.mxu0 0.0
    %1608 = vmatprep.subr.mxu0 0.0
    %1609 = vmatpush1.xpose.msra.mxu0 0.0
    %1610 = vmatprep.subr.mxu0 0.0
    %1611 = vmatpush1.xpose.msra.mxu0 0.0
    %1612 = vmatprep.subr.mxu0 0.0
    %1613 = vmatpush1.xpose.msra.mxu0 0.0
    %1614 = vmatprep.subr.mxu0 0.0
    %1615 = vmatpush1.xpose.msra.mxu0 0.0
    %1616 = vmatprep.subr.mxu0 0.0
    %1617 = vmatpush1.xpose.msra.mxu0 0.0
    %1618 = vmatprep.subr.mxu0 0.0
    %1619 = vmatpush1.xpose.msra.mxu0 0.0
    %1620 = vmatprep.subr.mxu0 0.0
    %1621 = vmatpush1.xpose.msra.mxu0 0.0
    %1622 = vmatprep.subr.mxu0 0.0
    %1623 = vmatpush1.xpose.msra.mxu0 0.0
    %1624 = vmatprep.subr.mxu0 0.0
    %1625 = vmatpush1.xpose.msra.mxu0 0.0
    %1626 = vmatprep.subr.mxu0 0.0
    %1627 = vmatpush1.xpose.msra.mxu0 0.0
    %1628 = vmatprep.subr.mxu0 0.0
    %1629 = vmatpush1.xpose.msra.mxu0 0.0
    %1630 = vmatprep.mubr.f32.mxu0 0.0
    %v1631 = vand.u32 %v1278, 4294901760
    %v1632 = vsub.f32 %v1278, %v1631
    %v1633 = vand.u32 %v1632, 4294901760
    %1634 = vmatmul.mubr.f32.gmra.mrb[0].mxu0 %v1633
    %v1635 = vpop.f32.mrb[0].mxu0
    %v1636 = vadd.f32 %v1548, %v1635
    %v1637 = vpop.f32.mrb[0].mxu0
    %1638 = vmatprep.mubr.f32.mxu0 0.0
    %v1639 = vand.u32 %v1284, 4294901760
    %v1640 = vsub.f32 %v1284, %v1639
    %v1641 = vand.u32 %v1640, 4294901760
    %1642 = vmatmul.mubr.f32.gmra.mrb[0].mxu0 %v1641
    %v1643 = vpop.f32.mrb[0].mxu0
    %v1644 = vadd.f32 %v1555, %v1643
    %v1645 = vpop.f32.mrb[0].mxu0
    %1646 = vmatprep.mubr.f32.mxu0 0.0
    %v1647 = vand.u32 %v1290, 4294901760
    %v1648 = vsub.f32 %v1290, %v1647
    %v1649 = vand.u32 %v1648, 4294901760
    %1650 = vmatmul.mubr.f32.gmra.mrb[0].mxu0 %v1649
    %v1651 = vpop.f32.mrb[0].mxu0
    %v1652 = vadd.f32 %v1562, %v1651
    %v1653 = vpop.f32.mrb[0].mxu0
    %1654 = vdwg.mxu0
    %1655 = vmatprep.subr.mxu0 0.0
    %v1656 = vand.u32 %v629, 4294901760
    %v1657 = vsub.f32 %v629, %v1656
    %v1658 = vand.u32 %v1657, 4294901760
    %1659 = vmatpush1.xpose.msra.mxu0 %v1658
    %1660 = vmatprep.subr.mxu0 0.0
    %1661 = vmatpush1.xpose.msra.mxu0 0.0
    %1662 = vmatprep.subr.mxu0 0.0
    %1663 = vmatpush1.xpose.msra.mxu0 0.0
    %1664 = vmatprep.subr.mxu0 0.0
    %1665 = vmatpush1.xpose.msra.mxu0 0.0
    %1666 = vmatprep.subr.mxu0 0.0
    %1667 = vmatpush1.xpose.msra.mxu0 0.0
    %1668 = vmatprep.subr.mxu0 0.0
    %1669 = vmatpush1.xpose.msra.mxu0 0.0
    %1670 = vmatprep.subr.mxu0 0.0
    %1671 = vmatpush1.xpose.msra.mxu0 0.0
    %1672 = vmatprep.subr.mxu0 0.0
    %1673 = vmatpush1.xpose.msra.mxu0 0.0
    %1674 = vmatprep.subr.mxu0 0.0
    %1675 = vmatpush1.xpose.msra.mxu0 0.0
    %1676 = vmatprep.subr.mxu0 0.0
    %1677 = vmatpush1.xpose.msra.mxu0 0.0
    %1678 = vmatprep.subr.mxu0 0.0
    %1679 = vmatpush1.xpose.msra.mxu0 0.0
    %1680 = vmatprep.subr.mxu0 0.0
    %1681 = vmatpush1.xpose.msra.mxu0 0.0
    %1682 = vmatprep.subr.mxu0 0.0
    %1683 = vmatpush1.xpose.msra.mxu0 0.0
    %1684 = vmatprep.subr.mxu0 0.0
    %1685 = vmatpush1.xpose.msra.mxu0 0.0
    %1686 = vmatprep.subr.mxu0 0.0
    %1687 = vmatpush1.xpose.msra.mxu0 0.0
    %1688 = vmatprep.subr.mxu0 0.0
    %1689 = vmatpush1.xpose.msra.mxu0 0.0
    %1690 = vmatprep.subr.mxu0 0.0
    %1691 = vmatpush1.xpose.msra.mxu0 0.0
    %1692 = vmatprep.subr.mxu0 0.0
    %1693 = vmatpush1.xpose.msra.mxu0 0.0
    %1694 = vmatprep.subr.mxu0 0.0
    %1695 = vmatpush1.xpose.msra.mxu0 0.0
    %1696 = vmatprep.subr.mxu0 0.0
    %1697 = vmatpush1.xpose.msra.mxu0 0.0
    %1698 = vmatprep.subr.mxu0 0.0
    %1699 = vmatpush1.xpose.msra.mxu0 0.0
    %1700 = vmatprep.subr.mxu0 0.0
    %1701 = vmatpush1.xpose.msra.mxu0 0.0
    %1702 = vmatprep.subr.mxu0 0.0
    %1703 = vmatpush1.xpose.msra.mxu0 0.0
    %1704 = vmatprep.subr.mxu0 0.0
    %1705 = vmatpush1.xpose.msra.mxu0 0.0
    %1706 = vmatprep.subr.mxu0 0.0
    %1707 = vmatpush1.xpose.msra.mxu0 0.0
    %1708 = vmatprep.subr.mxu0 0.0
    %1709 = vmatpush1.xpose.msra.mxu0 0.0
    %1710 = vmatprep.subr.mxu0 0.0
    %1711 = vmatpush1.xpose.msra.mxu0 0.0
    %1712 = vmatprep.subr.mxu0 0.0
    %1713 = vmatpush1.xpose.msra.mxu0 0.0
    %1714 = vmatprep.subr.mxu0 0.0
    %1715 = vmatpush1.xpose.msra.mxu0 0.0
    %1716 = vmatprep.subr.mxu0 0.0
    %1717 = vmatpush1.xpose.msra.mxu0 0.0
    %1718 = vmatprep.subr.mxu0 0.0
    %1719 = vmatpush1.xpose.msra.mxu0 0.0
    %1720 = vmatprep.subr.mxu0 0.0
    %1721 = vmatpush1.xpose.msra.mxu0 0.0
    %1722 = vmatprep.mubr.f32.mxu0 0.0
    %v1723 = vand.u32 %v1278, 4294901760
    %1724 = vmatmul.mubr.f32.gmra.mrb[0].mxu0 %v1723
    %v1725 = vpop.f32.mrb[0].mxu0
    %v1726 = vadd.f32 %v1636, %v1725
    %v1727 = vpop.f32.mrb[0].mxu0
    %1728 = vmatprep.mubr.f32.mxu0 0.0
    %v1729 = vand.u32 %v1284, 4294901760
    %1730 = vmatmul.mubr.f32.gmra.mrb[0].mxu0 %v1729
    %v1731 = vpop.f32.mrb[0].mxu0
    %v1732 = vadd.f32 %v1644, %v1731
    %v1733 = vpop.f32.mrb[0].mxu0
    %1734 = vmatprep.mubr.f32.mxu0 0.0
    %v1735 = vand.u32 %v1290, 4294901760
    %1736 = vmatmul.mubr.f32.gmra.mrb[0].mxu0 %v1735
    %v1737 = vpop.f32.mrb[0].mxu0
    %v1738 = vadd.f32 %v1652, %v1737
    %v1739 = vpop.f32.mrb[0].mxu0
    %1740 = vdwg.mxu0
    %1741 = vmatprep.subr.mxu0 0.0
    %v1742 = vand.u32 %v629, 4294901760
    %1743 = vmatpush1.xpose.msra.mxu0 %v1742
    %1744 = vmatprep.subr.mxu0 0.0
    %1745 = vmatpush1.xpose.msra.mxu0 0.0
    %1746 = vmatprep.subr.mxu0 0.0
    %1747 = vmatpush1.xpose.msra.mxu0 0.0
    %1748 = vmatprep.subr.mxu0 0.0
    %1749 = vmatpush1.xpose.msra.mxu0 0.0
    %1750 = vmatprep.subr.mxu0 0.0
    %1751 = vmatpush1.xpose.msra.mxu0 0.0
    %1752 = vmatprep.subr.mxu0 0.0
    %1753 = vmatpush1.xpose.msra.mxu0 0.0
    %1754 = vmatprep.subr.mxu0 0.0
    %1755 = vmatpush1.xpose.msra.mxu0 0.0
    %1756 = vmatprep.subr.mxu0 0.0
    %1757 = vmatpush1.xpose.msra.mxu0 0.0
    %1758 = vmatprep.subr.mxu0 0.0
    %1759 = vmatpush1.xpose.msra.mxu0 0.0
    %1760 = vmatprep.subr.mxu0 0.0
    %1761 = vmatpush1.xpose.msra.mxu0 0.0
    %1762 = vmatprep.subr.mxu0 0.0
    %1763 = vmatpush1.xpose.msra.mxu0 0.0
    %1764 = vmatprep.subr.mxu0 0.0
    %1765 = vmatpush1.xpose.msra.mxu0 0.0
    %1766 = vmatprep.subr.mxu0 0.0
    %1767 = vmatpush1.xpose.msra.mxu0 0.0
    %1768 = vmatprep.subr.mxu0 0.0
    %1769 = vmatpush1.xpose.msra.mxu0 0.0
    %1770 = vmatprep.subr.mxu0 0.0
    %1771 = vmatpush1.xpose.msra.mxu0 0.0
    %1772 = vmatprep.subr.mxu0 0.0
    %1773 = vmatpush1.xpose.msra.mxu0 0.0
    %1774 = vmatprep.subr.mxu0 0.0
    %1775 = vmatpush1.xpose.msra.mxu0 0.0
    %1776 = vmatprep.subr.mxu0 0.0
    %1777 = vmatpush1.xpose.msra.mxu0 0.0
    %1778 = vmatprep.subr.mxu0 0.0
    %1779 = vmatpush1.xpose.msra.mxu0 0.0
    %1780 = vmatprep.subr.mxu0 0.0
    %1781 = vmatpush1.xpose.msra.mxu0 0.0
    %1782 = vmatprep.subr.mxu0 0.0
    %1783 = vmatpush1.xpose.msra.mxu0 0.0
    %1784 = vmatprep.subr.mxu0 0.0
    %1785 = vmatpush1.xpose.msra.mxu0 0.0
    %1786 = vmatprep.subr.mxu0 0.0
    %1787 = vmatpush1.xpose.msra.mxu0 0.0
    %1788 = vmatprep.subr.mxu0 0.0
    %1789 = vmatpush1.xpose.msra.mxu0 0.0
    %1790 = vmatprep.subr.mxu0 0.0
    %1791 = vmatpush1.xpose.msra.mxu0 0.0
    %1792 = vmatprep.subr.mxu0 0.0
    %1793 = vmatpush1.xpose.msra.mxu0 0.0
    %1794 = vmatprep.subr.mxu0 0.0
    %1795 = vmatpush1.xpose.msra.mxu0 0.0
    %1796 = vmatprep.subr.mxu0 0.0
    %1797 = vmatpush1.xpose.msra.mxu0 0.0
    %1798 = vmatprep.subr.mxu0 0.0
    %1799 = vmatpush1.xpose.msra.mxu0 0.0
    %1800 = vmatprep.subr.mxu0 0.0
    %1801 = vmatpush1.xpose.msra.mxu0 0.0
    %1802 = vmatprep.subr.mxu0 0.0
    %1803 = vmatpush1.xpose.msra.mxu0 0.0
    %1804 = vmatprep.subr.mxu0 0.0
    %1805 = vmatpush1.xpose.msra.mxu0 0.0
    %1806 = vmatprep.mubr.f32.mxu0 0.0
    %v1807 = vand.u32 %v1278, 4294901760
    %1808 = vmatmul.mubr.f32.gmra.mrb[0].mxu0 %v1807
    %v1809 = vpop.f32.mrb[0].mxu0
    %v1810 = vadd.f32 %v1726, %v1809
    %v1811 = vpop.f32.mrb[0].mxu0
    %1812 = vmatprep.mubr.f32.mxu0 0.0
    %v1813 = vand.u32 %v1284, 4294901760
    %1814 = vmatmul.mubr.f32.gmra.mrb[0].mxu0 %v1813
    %v1815 = vpop.f32.mrb[0].mxu0
    %v1816 = vadd.f32 %v1732, %v1815
    %v1817 = vpop.f32.mrb[0].mxu0
    %1818 = vmatprep.mubr.f32.mxu0 0.0
    %v1819 = vand.u32 %v1290, 4294901760
    %1820 = vmatmul.mubr.f32.gmra.mrb[0].mxu0 %v1819
    %v1821 = vpop.f32.mrb[0].mxu0
    %v1822 = vadd.f32 %v1738, %v1821
    %v1823 = vpop.f32.mrb[0].mxu0
    %1824 = vdwg.mxu0
    %v1825 = vld [vmem:[%s2] sm:$0xff]
    %v1826 = vld [vmem:[%s2 + $0x8] sm:$0xff]
    %v1827 = vld [vmem:[%s2 + $0x10] sm:$0xff]
    %v1828 = vmul.f32 %v1810, %v1825
    %v1829 = vmul.f32 %v1816, %v1826
    %v1830 = vmul.f32 %v1822, %v1827
    %vm1831 = vcmask 31744
    %v1832 = vsel %vm1831, %v1828, 0.0
    %1833 = vadd.xlane.f32.xlu0 %v1832
    %v1834 = vpop.xlane.xlu0 %1833
    %v1835 = vsel %vm1831, %v1829, 0.0
    %1836 = vadd.xlane.f32.xlu0 %v1835
    %v1837 = vpop.xlane.xlu0 %1836
    %v1838 = vsel %vm1831, %v1830, 0.0
    %1839 = vadd.xlane.f32.xlu0 %v1838
    %v1840 = vpop.xlane.xlu0 %1839
    %v1841 = vmax.f32 %v1834, 0.0
    %v1842 = vmax.f32 %v1837, 0.0
    %v1843 = vmax.f32 %v1840, 0.0
    %vm1844 = vcmp.ne.f32.partialorder %v1834, %v1834
    %vm1845 = vcmp.ne.f32.partialorder %v1837, %v1837
    %vm1846 = vcmp.ne.f32.partialorder %v1840, %v1840
    %v1847 = vadd.f32 %v1834, 0.0
    %v1848 = vadd.f32 %v1837, 0.0
    %v1849 = vadd.f32 %v1840, 0.0
    %v1850 = vand.u32 2147483647, %v1834
    %v1851 = vand.u32 2147483647, %v1837
    %v1852 = vand.u32 2147483647, %v1840
    %v1853 = vsub.f32 0.0, %v1850
    %v1854 = vsub.f32 0.0, %v1851
    %v1855 = vsub.f32 0.0, %v1852
    %v1856 = vmul.f32 %v1853, 1.442695
    %v1857 = vpow.pop %v1856
    %v1858 = vmul.f32 %v1854, 1.442695
    %v1859 = vpow.pop %v1858
    %v1860 = vmul.f32 %v1855, 1.442695
    %v1861 = vpow.pop %v1860
    %v1862 = vadd.f32 %v1857, 1.0
    %v1863 = vlog2.pop %v1862
    %v1864 = vmul.f32 %v1863, 0.6931472
    %v1865 = vmul.f32 -0.5, %v1857
    %v1866 = vadd.f32 %v1865, 1.0
    %v1867 = vmul.f32 %v1866, %v1857
    %v1868 = vand.u32 2147483647, %v1857
    %vm1869 = vcmp.lt.f32.partialorder %v1868, 0.0004427343
    %v1870 = vsel %vm1869, %v1867, %v1864
    %v1871 = vadd.f32 %v1859, 1.0
    %v1872 = vlog2.pop %v1871
    %v1873 = vmul.f32 %v1872, 0.6931472
    %v1874 = vmul.f32 -0.5, %v1859
    %v1875 = vadd.f32 %v1874, 1.0
    %v1876 = vmul.f32 %v1875, %v1859
    %v1877 = vand.u32 2147483647, %v1859
    %vm1878 = vcmp.lt.f32.partialorder %v1877, 0.0004427343
    %v1879 = vsel %vm1878, %v1876, %v1873
    %v1880 = vadd.f32 %v1861, 1.0
    %v1881 = vlog2.pop %v1880
    %v1882 = vmul.f32 %v1881, 0.6931472
    %v1883 = vmul.f32 -0.5, %v1861
    %v1884 = vadd.f32 %v1883, 1.0
    %v1885 = vmul.f32 %v1884, %v1861
    %v1886 = vand.u32 2147483647, %v1861
    %vm1887 = vcmp.lt.f32.partialorder %v1886, 0.0004427343
    %v1888 = vsel %vm1887, %v1885, %v1882
    %v1889 = vadd.f32 %v1841, %v1870
    %v1890 = vadd.f32 %v1842, %v1879
    %v1891 = vadd.f32 %v1843, %v1888
    %v1892 = vsel %vm1844, %v1847, %v1889
    %v1893 = vsel %vm1845, %v1848, %v1890
    %v1894 = vsel %vm1846, %v1849, %v1891
    %v1895 = vld [vmem:[%s3] sm:$0xff]
    %v1896 = vld [vmem:[%s3 + $0x8] sm:$0xff]
    %v1897 = vld [vmem:[%s3 + $0x10] sm:$0xff]
    %v1898 = vmul.f32 %v1892, %v1895
    %v1899 = vmul.f32 %v1893, %v1896
    %v1900 = vmul.f32 %v1894, %v1897
    %vm1901 = vcmask 7168
    %v1902 = vsel %vm1901, %v1898, 0.0
    %v1903 = vsel %vm1901, %v1899, 0.0
    %v1904 = vadd.f32 %v1902, %v1903
    %v1905 = vsel %vm1901, %v1900, 0.0
    %v1906 = vadd.f32 %v1904, %v1905
    %1907 = vadd.xlane.f32.xlu0 %v1906
    %v1908 = vpop.xlane.xlu0 %1907
    %v1909 = vrot.slane %v1908, 4
    %v1910 = vadd.f32 %v1908, %v1909
    %v1911 = vrot.slane %v1910, 2
    %v1912 = vadd.f32 %v1910, %v1911
    %v1913 = vrot.slane %v1912, 1
    %v1914 = vadd.f32 %v1912, %v1913
    %s1915 = vtos %v1914
    %s1916 = scalar_lea.smem [#allocation5], 0
    %1917 = sst [smem:[%s1916]] %s1915
    // Predicated region
    $region30: #{tpu_custom_call.1} parent=1 // pred_check
      _
    $region31: #{tpu_custom_call.1} parent=1 // pred_check_branch
      %1919 = sbr.rel (0) target = $region33
    $region32: #{tpu_custom_call.1} parent=1 // pred_region
      %s1921 = ssub.s32 16, 16
      %1922 = vsyncadd [#allocation4], %s1921
      %1925 = dma.smem_to_hbm [#allocation5], 16, %s6, [#allocation4]
    $region33: #{tpu_custom_call.1} parent=1 // pred_fallthru
      _
    // Predicated region
    $region34: #{tpu_custom_call.1} parent=1 // pred_check
      _
    $region35: #{tpu_custom_call.1} parent=1 // pred_check_branch
      %1927 = sbr.rel (0) target = $region37
    $region36: #{tpu_custom_call.1} parent=1 // pred_region
      %1928 = dma.done [#allocation4], 16
    $region37: #{tpu_custom_call.1} parent=1 // pred_fallthru
      _
    %1929 = sfence
    %1930 = vsyncpa [#allocation3], 1
    %1931 = vsyncpa [#allocation4], 1

</llo_original>
